<compile_context>
chip_gen: v7x
topology: tpu7x:2x2x1
jax: 0.10.0
libtpu: 0.0.40
codegen_flags: <defaults>
</compile_context>

<pallas_src>
import jax
import jax.numpy as jnp
from jax import lax
from jax.experimental import pallas as pl
from jax.experimental.pallas import tpu as pltpu

LANE = 128


def _lstm_fused_kernel(x_ref, wih_ref, whh_ref, bias_ref, wfc_ref, bfc_ref,
                       out_ref, gx_ref, hs_ref):
    """Input projection + LSTM recurrence + batched fc, all in one invocation.

    x_ref   : (T, B, D)   f32  time-major input
    wih_ref : (D, 4H)     f32  W_ih^T
    whh_ref : (H, 4H)     f32  W_hh^T
    bias_ref: (1, 4H)     f32  b_ih + b_hh
    wfc_ref : (H, OP)     f32  W_fc^T zero-padded to OP = round_up(O, 128) lanes
    bfc_ref : (1, OP)     f32  b_fc zero-padded
    out_ref : (T, B, OP)  f32  fc(lstm_out), time-major, lane-dense
    gx_ref  : (T, B, 4H)  f32  VMEM scratch: input projection for every timestep
    hs_ref  : (T, B, H)   f32  VMEM scratch: hidden state of every timestep
    """
    T, B, D = x_ref.shape
    H = whh_ref.shape[0]

    # 1) Input projection for ALL timesteps: one big MXU matmul, off the serial path.
    x_all = x_ref[...].reshape(T * B, D)
    gx = (jnp.dot(x_all, wih_ref[...], preferred_element_type=jnp.float32)
          + bias_ref[...])
    gx_ref[...] = gx.reshape(T, B, 4 * H)

    whh = whh_ref[...]                      # W_hh^T stays resident in vregs

    # 2) Serial recurrence: T is static -> fully unrolled; h/c never touch VMEM.
    h = jnp.zeros((B, H), jnp.float32)
    c = jnp.zeros((B, H), jnp.float32)
    for t in range(T):
        gates = gx_ref[t] + jnp.dot(h, whh, preferred_element_type=jnp.float32)
        # PyTorch gate order: i, f, g, o (lane slices within one (B, 4H) tile).
        i_g = jax.nn.sigmoid(gates[:, 0 * H:1 * H])
        f_g = jax.nn.sigmoid(gates[:, 1 * H:2 * H])
        g_g = jnp.tanh(gates[:, 2 * H:3 * H])
        o_g = jax.nn.sigmoid(gates[:, 3 * H:4 * H])
        c = f_g * c + i_g * g_g
        h = o_g * jnp.tanh(c)
        hs_ref[t] = h

    # 3) One batched, lane-dense fc over all timesteps: (T*B, H) x (H, OP).
    hs = hs_ref[...].reshape(T * B, H)
    y = (jnp.dot(hs, wfc_ref[...], preferred_element_type=jnp.float32)
         + bfc_ref[...])
    out_ref[...] = y.reshape(T, B, -1).astype(out_ref.dtype)


def lstm_classifier_forward(x, params):
    """x: (B, T, D) float32 -> (B, T, O) float32, same as the PyTorch forward."""
    B, T, D = x.shape
    w_ih = params["w_ih"]     # (4H, D)
    w_hh = params["w_hh"]     # (4H, H)
    b_ih = params["b_ih"]     # (4H,)
    b_hh = params["b_hh"]     # (4H,)
    w_fc = params["w_fc"]     # (O, H)
    b_fc = params["b_fc"]     # (O,)

    H = w_hh.shape[1]
    O = w_fc.shape[0]
    OP = pl.cdiv(O, LANE) * LANE            # lane-dense fc output width

    # Tiny XLA relayouts/pads at the boundary; all matmuls happen in the kernel.
    x_tm = jnp.transpose(x, (1, 0, 2)).astype(jnp.float32)          # (T, B, D)
    wih_t = jnp.transpose(w_ih).astype(jnp.float32)                 # (D, 4H)
    whh_t = jnp.transpose(w_hh).astype(jnp.float32)                 # (H, 4H)
    bias = (b_ih + b_hh).astype(jnp.float32).reshape(1, 4 * H)      # (1, 4H)
    wfc_p = jnp.zeros((H, OP), jnp.float32).at[:, :O].set(jnp.transpose(w_fc))
    bfc_p = jnp.zeros((1, OP), jnp.float32).at[:, :O].set(b_fc.reshape(1, O))

    vmem = pltpu.MemorySpace.VMEM
    out_tm = pl.pallas_call(
        _lstm_fused_kernel,
        out_shape=jax.ShapeDtypeStruct((T, B, OP), jnp.float32),
        in_specs=[
            pl.BlockSpec(memory_space=vmem),   # x (T, B, D)
            pl.BlockSpec(memory_space=vmem),   # W_ih^T
            pl.BlockSpec(memory_space=vmem),   # W_hh^T
            pl.BlockSpec(memory_space=vmem),   # b_ih + b_hh
            pl.BlockSpec(memory_space=vmem),   # W_fc^T (lane-padded)
            pl.BlockSpec(memory_space=vmem),   # b_fc   (lane-padded)
        ],
        out_specs=pl.BlockSpec(memory_space=vmem),
        scratch_shapes=[pltpu.VMEM((T, B, 4 * H), jnp.float32),
                        pltpu.VMEM((T, B, H), jnp.float32)],
    )(x_tm, wih_t, whh_t, bias, wfc_p, bfc_p)

    # (T, B, OP) -> (B, T, O): one tiny XLA relayout fused with the un-pad slice.
    return jnp.transpose(out_tm, (1, 0, 2))[:, :, :O]


def lstm_classifier_reference(x, params):
    """Pure-JAX reference (lax.scan) mirroring PyTorch nn.LSTM + nn.Linear."""
    B, T, D = x.shape
    w_ih, w_hh = params["w_ih"], params["w_hh"]
    b = params["b_ih"] + params["b_hh"]
    w_fc, b_fc = params["w_fc"], params["b_fc"]
    H = w_hh.shape[1]

    def step(carry, x_t):
        h, c = carry
        gates = x_t @ w_ih.T + h @ w_hh.T + b
        i = jax.nn.sigmoid(gates[:, 0 * H:1 * H])
        f = jax.nn.sigmoid(gates[:, 1 * H:2 * H])
        g = jnp.tanh(gates[:, 2 * H:3 * H])
        o = jax.nn.sigmoid(gates[:, 3 * H:4 * H])
        c = f * c + i * g
        h = o * jnp.tanh(c)
        return (h, c), h

    h0 = jnp.zeros((B, H), jnp.float32)
    c0 = jnp.zeros((B, H), jnp.float32)
    _, hs = lax.scan(step, (h0, c0), jnp.transpose(x, (1, 0, 2)))  # (T, B, H)
    lstm_out = jnp.transpose(hs, (1, 0, 2))                        # (B, T, H)
    return lstm_out @ w_fc.T + b_fc                                # (B, T, O)


def init_params(key, input_dim, hidden_dim, output_dim):
    """Deterministic init matching PyTorch shapes (uniform(-1/sqrt(H), 1/sqrt(H)))."""
    ks = jax.random.split(key, 6)
    s = 1.0 / jnp.sqrt(hidden_dim)
    u = lambda k, shape: jax.random.uniform(k, shape, jnp.float32, -s, s)
    return {
        "w_ih": u(ks[0], (4 * hidden_dim, input_dim)),
        "w_hh": u(ks[1], (4 * hidden_dim, hidden_dim)),
        "b_ih": u(ks[2], (4 * hidden_dim,)),
        "b_hh": u(ks[3], (4 * hidden_dim,)),
        "w_fc": u(ks[4], (output_dim, hidden_dim)),
        "b_fc": u(ks[5], (output_dim,)),
    }


if __name__ == "__main__":
    B, T, D, H, O = 8, 8, 16, 32, 2

    key = jax.random.PRNGKey(0)
    k_x, k_p = jax.random.split(key)
    x = jax.random.normal(k_x, (B, T, D), jnp.float32)
    params = init_params(k_p, D, H, O)

    fwd = jax.jit(lstm_classifier_forward)
    out = jax.block_until_ready(fwd(x, params))
    ref = jax.block_until_ready(lstm_classifier_reference(x, params))

    assert out.shape == (B, T, O), out.shape
    max_err = float(jnp.max(jnp.abs(out - ref)))
    assert jnp.allclose(out, ref, atol=2e-5, rtol=2e-5), max_err

    print("KERNEL_OK")
</pallas_src>

<mosaic_0001>
module attributes {stable_mosaic.version = 11 : i64} {
  func.func @_lstm_fused_kernel(%arg0: memref<8x8x16xf32, #tpu.memory_space<vmem>>, %arg1: memref<16x128xf32, #tpu.memory_space<vmem>>, %arg2: memref<32x128xf32, #tpu.memory_space<vmem>>, %arg3: memref<1x128xf32, #tpu.memory_space<vmem>>, %arg4: memref<32x128xf32, #tpu.memory_space<vmem>>, %arg5: memref<1x128xf32, #tpu.memory_space<vmem>>, %arg6: memref<8x8x128xf32, #tpu.memory_space<vmem>>, %arg7: memref<8x8x128xf32, #tpu.memory_space<vmem>>, %arg8: memref<8x8x32xf32, #tpu.memory_space<vmem>>) attributes {dimension_semantics = [], scalar_prefetch = 0 : i64, scratch_operands = 2 : i64, tpu.core_type = #tpu.core_type<tc>} {
    %c0 = arith.constant 0 : index
    %c0_0 = arith.constant 0 : index
    %c0_1 = arith.constant 0 : index
    %0 = vector.load %arg0[%c0, %c0_0, %c0_1] : memref<8x8x16xf32, #tpu.memory_space<vmem>>, vector<8x8x16xf32>
    %1 = vector.shape_cast %0 : vector<8x8x16xf32> to vector<64x16xf32>
    %c0_2 = arith.constant 0 : index
    %c0_3 = arith.constant 0 : index
    %2 = vector.load %arg1[%c0_2, %c0_3] : memref<16x128xf32, #tpu.memory_space<vmem>>, vector<16x128xf32>
    %cst = arith.constant dense<0.000000e+00> : vector<64x128xf32>
    %3 = tpu.matmul %1, %2, %cst {dimension_numbers = #tpu.dot_dimension_numbers<[1], [0], [0], [1], [0, 0, 1, 1], [], []>} : vector<64x16xf32>, vector<16x128xf32>, vector<64x128xf32> -> vector<64x128xf32>
    %c0_4 = arith.constant 0 : index
    %c0_5 = arith.constant 0 : index
    %4 = vector.load %arg3[%c0_4, %c0_5] : memref<1x128xf32, #tpu.memory_space<vmem>>, vector<1x128xf32>
    %5 = vector.broadcast %4 : vector<1x128xf32> to vector<64x128xf32>
    %6 = arith.addf %3, %5 : vector<64x128xf32>
    %7 = vector.shape_cast %6 : vector<64x128xf32> to vector<8x8x128xf32>
    %c0_6 = arith.constant 0 : index
    %c0_7 = arith.constant 0 : index
    %c0_8 = arith.constant 0 : index
    %8 = vector.load %arg7[%c0_6, %c0_7, %c0_8] : memref<8x8x128xf32, #tpu.memory_space<vmem>>, vector<8x8x128xf32>
    tpu.vector_store %arg7[%c0_6, %c0_7, %c0_8], %7 {strides = array<i32>} : memref<8x8x128xf32, #tpu.memory_space<vmem>>, vector<8x8x128xf32>,
    %c0_9 = arith.constant 0 : index
    %c0_10 = arith.constant 0 : index
    %9 = vector.load %arg2[%c0_9, %c0_10] : memref<32x128xf32, #tpu.memory_space<vmem>>, vector<32x128xf32>
    %cst_11 = arith.constant 0.000000e+00 : f32
    %10 = vector.broadcast %cst_11 : f32 to vector<8x32xf32>
    %cst_12 = arith.constant 0.000000e+00 : f32
    %11 = vector.broadcast %cst_12 : f32 to vector<8x32xf32>
    %c0_13 = arith.constant 0 : index
    %c0_14 = arith.constant 0 : index
    %c0_15 = arith.constant 0 : index
    %12 = vector.load %arg7[%c0_13, %c0_14, %c0_15] : memref<8x8x128xf32, #tpu.memory_space<vmem>>, vector<1x8x128xf32>
    %13 = vector.shape_cast %12 : vector<1x8x128xf32> to vector<8x128xf32>
    %cst_16 = arith.constant dense<0.000000e+00> : vector<8x128xf32>
    %14 = tpu.matmul %10, %9, %cst_16 {dimension_numbers = #tpu.dot_dimension_numbers<[1], [0], [0], [1], [0, 0, 1, 1], [], []>} : vector<8x32xf32>, vector<32x128xf32>, vector<8x128xf32> -> vector<8x128xf32>
    %15 = arith.addf %13, %14 : vector<8x128xf32>
    %16 = vector.extract_strided_slice %15 {offsets = [0, 0], sizes = [8, 32], strides = [1, 1]} : vector<8x128xf32> to vector<8x32xf32>
    %17 = arith.negf %16 : vector<8x32xf32>
    %18 = math.exp %17 : vector<8x32xf32>
    %cst_17 = arith.constant 1.000000e+00 : f32
    %19 = vector.broadcast %cst_17 : f32 to vector<8x32xf32>
    %20 = arith.addf %19, %18 : vector<8x32xf32>
    %21 = arith.divf %19, %20 : vector<8x32xf32>
    %22 = vector.extract_strided_slice %15 {offsets = [0, 32], sizes = [8, 32], strides = [1, 1]} : vector<8x128xf32> to vector<8x32xf32>
    %23 = arith.negf %22 : vector<8x32xf32>
    %24 = math.exp %23 : vector<8x32xf32>
    %cst_18 = arith.constant 1.000000e+00 : f32
    %25 = vector.broadcast %cst_18 : f32 to vector<8x32xf32>
    %26 = arith.addf %25, %24 : vector<8x32xf32>
    %27 = arith.divf %25, %26 : vector<8x32xf32>
    %28 = vector.extract_strided_slice %15 {offsets = [0, 64], sizes = [8, 32], strides = [1, 1]} : vector<8x128xf32> to vector<8x32xf32>
    %29 = math.tanh %28 : vector<8x32xf32>
    %30 = vector.extract_strided_slice %15 {offsets = [0, 96], sizes = [8, 32], strides = [1, 1]} : vector<8x128xf32> to vector<8x32xf32>
    %31 = arith.negf %30 : vector<8x32xf32>
    %32 = math.exp %31 : vector<8x32xf32>
    %cst_19 = arith.constant 1.000000e+00 : f32
    %33 = vector.broadcast %cst_19 : f32 to vector<8x32xf32>
    %34 = arith.addf %33, %32 : vector<8x32xf32>
    %35 = arith.divf %33, %34 : vector<8x32xf32>
    %36 = arith.mulf %27, %11 : vector<8x32xf32>
    %37 = arith.mulf %21, %29 : vector<8x32xf32>
    %38 = arith.addf %36, %37 : vector<8x32xf32>
    %39 = math.tanh %38 : vector<8x32xf32>
    %40 = arith.mulf %35, %39 : vector<8x32xf32>
    %c0_20 = arith.constant 0 : index
    %c0_21 = arith.constant 0 : index
    %c0_22 = arith.constant 0 : index
    %41 = vector.load %arg8[%c0_20, %c0_21, %c0_22] : memref<8x8x32xf32, #tpu.memory_space<vmem>>, vector<1x8x32xf32>
    %42 = vector.shape_cast %41 : vector<1x8x32xf32> to vector<8x32xf32>
    %43 = vector.shape_cast %40 : vector<8x32xf32> to vector<1x8x32xf32>
    tpu.vector_store %arg8[%c0_20, %c0_21, %c0_22], %43 {strides = array<i32>} : memref<8x8x32xf32, #tpu.memory_space<vmem>>, vector<1x8x32xf32>,
    %c1 = arith.constant 1 : index
    %c0_23 = arith.constant 0 : index
    %c0_24 = arith.constant 0 : index
    %44 = vector.load %arg7[%c1, %c0_23, %c0_24] : memref<8x8x128xf32, #tpu.memory_space<vmem>>, vector<1x8x128xf32>
    %45 = vector.shape_cast %44 : vector<1x8x128xf32> to vector<8x128xf32>
    %cst_25 = arith.constant dense<0.000000e+00> : vector<8x128xf32>
    %46 = tpu.matmul %40, %9, %cst_25 {dimension_numbers = #tpu.dot_dimension_numbers<[1], [0], [0], [1], [0, 0, 1, 1], [], []>} : vector<8x32xf32>, vector<32x128xf32>, vector<8x128xf32> -> vector<8x128xf32>
    %47 = arith.addf %45, %46 : vector<8x128xf32>
    %48 = vector.extract_strided_slice %47 {offsets = [0, 0], sizes = [8, 32], strides = [1, 1]} : vector<8x128xf32> to vector<8x32xf32>
    %49 = arith.negf %48 : vector<8x32xf32>
    %50 = math.exp %49 : vector<8x32xf32>
    %cst_26 = arith.constant 1.000000e+00 : f32
    %51 = vector.broadcast %cst_26 : f32 to vector<8x32xf32>
    %52 = arith.addf %51, %50 : vector<8x32xf32>
    %53 = arith.divf %51, %52 : vector<8x32xf32>
    %54 = vector.extract_strided_slice %47 {offsets = [0, 32], sizes = [8, 32], strides = [1, 1]} : vector<8x128xf32> to vector<8x32xf32>
    %55 = arith.negf %54 : vector<8x32xf32>
    %56 = math.exp %55 : vector<8x32xf32>
    %cst_27 = arith.constant 1.000000e+00 : f32
    %57 = vector.broadcast %cst_27 : f32 to vector<8x32xf32>
    %58 = arith.addf %57, %56 : vector<8x32xf32>
    %59 = arith.divf %57, %58 : vector<8x32xf32>
    %60 = vector.extract_strided_slice %47 {offsets = [0, 64], sizes = [8, 32], strides = [1, 1]} : vector<8x128xf32> to vector<8x32xf32>
    %61 = math.tanh %60 : vector<8x32xf32>
    %62 = vector.extract_strided_slice %47 {offsets = [0, 96], sizes = [8, 32], strides = [1, 1]} : vector<8x128xf32> to vector<8x32xf32>
    %63 = arith.negf %62 : vector<8x32xf32>
    %64 = math.exp %63 : vector<8x32xf32>
    %cst_28 = arith.constant 1.000000e+00 : f32
    %65 = vector.broadcast %cst_28 : f32 to vector<8x32xf32>
    %66 = arith.addf %65, %64 : vector<8x32xf32>
    %67 = arith.divf %65, %66 : vector<8x32xf32>
    %68 = arith.mulf %59, %38 : vector<8x32xf32>
    %69 = arith.mulf %53, %61 : vector<8x32xf32>
    %70 = arith.addf %68, %69 : vector<8x32xf32>
    %71 = math.tanh %70 : vector<8x32xf32>
    %72 = arith.mulf %67, %71 : vector<8x32xf32>
    %c1_29 = arith.constant 1 : index
    %c0_30 = arith.constant 0 : index
    %c0_31 = arith.constant 0 : index
    %73 = vector.load %arg8[%c1_29, %c0_30, %c0_31] : memref<8x8x32xf32, #tpu.memory_space<vmem>>, vector<1x8x32xf32>
    %74 = vector.shape_cast %73 : vector<1x8x32xf32> to vector<8x32xf32>
    %75 = vector.shape_cast %72 : vector<8x32xf32> to vector<1x8x32xf32>
    tpu.vector_store %arg8[%c1_29, %c0_30, %c0_31], %75 {strides = array<i32>} : memref<8x8x32xf32, #tpu.memory_space<vmem>>, vector<1x8x32xf32>,
    %c2 = arith.constant 2 : index
    %c0_32 = arith.constant 0 : index
    %c0_33 = arith.constant 0 : index
    %76 = vector.load %arg7[%c2, %c0_32, %c0_33] : memref<8x8x128xf32, #tpu.memory_space<vmem>>, vector<1x8x128xf32>
    %77 = vector.shape_cast %76 : vector<1x8x128xf32> to vector<8x128xf32>
    %cst_34 = arith.constant dense<0.000000e+00> : vector<8x128xf32>
    %78 = tpu.matmul %72, %9, %cst_34 {dimension_numbers = #tpu.dot_dimension_numbers<[1], [0], [0], [1], [0, 0, 1, 1], [], []>} : vector<8x32xf32>, vector<32x128xf32>, vector<8x128xf32> -> vector<8x128xf32>
    %79 = arith.addf %77, %78 : vector<8x128xf32>
    %80 = vector.extract_strided_slice %79 {offsets = [0, 0], sizes = [8, 32], strides = [1, 1]} : vector<8x128xf32> to vector<8x32xf32>
    %81 = arith.negf %80 : vector<8x32xf32>
    %82 = math.exp %81 : vector<8x32xf32>
    %cst_35 = arith.constant 1.000000e+00 : f32
    %83 = vector.broadcast %cst_35 : f32 to vector<8x32xf32>
    %84 = arith.addf %83, %82 : vector<8x32xf32>
    %85 = arith.divf %83, %84 : vector<8x32xf32>
    %86 = vector.extract_strided_slice %79 {offsets = [0, 32], sizes = [8, 32], strides = [1, 1]} : vector<8x128xf32> to vector<8x32xf32>
    %87 = arith.negf %86 : vector<8x32xf32>
    %88 = math.exp %87 : vector<8x32xf32>
    %cst_36 = arith.constant 1.000000e+00 : f32
    %89 = vector.broadcast %cst_36 : f32 to vector<8x32xf32>
    %90 = arith.addf %89, %88 : vector<8x32xf32>
    %91 = arith.divf %89, %90 : vector<8x32xf32>
    %92 = vector.extract_strided_slice %79 {offsets = [0, 64], sizes = [8, 32], strides = [1, 1]} : vector<8x128xf32> to vector<8x32xf32>
    %93 = math.tanh %92 : vector<8x32xf32>
    %94 = vector.extract_strided_slice %79 {offsets = [0, 96], sizes = [8, 32], strides = [1, 1]} : vector<8x128xf32> to vector<8x32xf32>
    %95 = arith.negf %94 : vector<8x32xf32>
    %96 = math.exp %95 : vector<8x32xf32>
    %cst_37 = arith.constant 1.000000e+00 : f32
    %97 = vector.broadcast %cst_37 : f32 to vector<8x32xf32>
    %98 = arith.addf %97, %96 : vector<8x32xf32>
    %99 = arith.divf %97, %98 : vector<8x32xf32>
    %100 = arith.mulf %91, %70 : vector<8x32xf32>
    %101 = arith.mulf %85, %93 : vector<8x32xf32>
    %102 = arith.addf %100, %101 : vector<8x32xf32>
    %103 = math.tanh %102 : vector<8x32xf32>
    %104 = arith.mulf %99, %103 : vector<8x32xf32>
    %c2_38 = arith.constant 2 : index
    %c0_39 = arith.constant 0 : index
    %c0_40 = arith.constant 0 : index
    %105 = vector.load %arg8[%c2_38, %c0_39, %c0_40] : memref<8x8x32xf32, #tpu.memory_space<vmem>>, vector<1x8x32xf32>
    %106 = vector.shape_cast %105 : vector<1x8x32xf32> to vector<8x32xf32>
    %107 = vector.shape_cast %104 : vector<8x32xf32> to vector<1x8x32xf32>
    tpu.vector_store %arg8[%c2_38, %c0_39, %c0_40], %107 {strides = array<i32>} : memref<8x8x32xf32, #tpu.memory_space<vmem>>, vector<1x8x32xf32>,
    %c3 = arith.constant 3 : index
    %c0_41 = arith.constant 0 : index
    %c0_42 = arith.constant 0 : index
    %108 = vector.load %arg7[%c3, %c0_41, %c0_42] : memref<8x8x128xf32, #tpu.memory_space<vmem>>, vector<1x8x128xf32>
    %109 = vector.shape_cast %108 : vector<1x8x128xf32> to vector<8x128xf32>
    %cst_43 = arith.constant dense<0.000000e+00> : vector<8x128xf32>
    %110 = tpu.matmul %104, %9, %cst_43 {dimension_numbers = #tpu.dot_dimension_numbers<[1], [0], [0], [1], [0, 0, 1, 1], [], []>} : vector<8x32xf32>, vector<32x128xf32>, vector<8x128xf32> -> vector<8x128xf32>
    %111 = arith.addf %109, %110 : vector<8x128xf32>
    %112 = vector.extract_strided_slice %111 {offsets = [0, 0], sizes = [8, 32], strides = [1, 1]} : vector<8x128xf32> to vector<8x32xf32>
    %113 = arith.negf %112 : vector<8x32xf32>
    %114 = math.exp %113 : vector<8x32xf32>
    %cst_44 = arith.constant 1.000000e+00 : f32
    %115 = vector.broadcast %cst_44 : f32 to vector<8x32xf32>
    %116 = arith.addf %115, %114 : vector<8x32xf32>
    %117 = arith.divf %115, %116 : vector<8x32xf32>
    %118 = vector.extract_strided_slice %111 {offsets = [0, 32], sizes = [8, 32], strides = [1, 1]} : vector<8x128xf32> to vector<8x32xf32>
    %119 = arith.negf %118 : vector<8x32xf32>
    %120 = math.exp %119 : vector<8x32xf32>
    %cst_45 = arith.constant 1.000000e+00 : f32
    %121 = vector.broadcast %cst_45 : f32 to vector<8x32xf32>
    %122 = arith.addf %121, %120 : vector<8x32xf32>
    %123 = arith.divf %121, %122 : vector<8x32xf32>
    %124 = vector.extract_strided_slice %111 {offsets = [0, 64], sizes = [8, 32], strides = [1, 1]} : vector<8x128xf32> to vector<8x32xf32>
    %125 = math.tanh %124 : vector<8x32xf32>
    %126 = vector.extract_strided_slice %111 {offsets = [0, 96], sizes = [8, 32], strides = [1, 1]} : vector<8x128xf32> to vector<8x32xf32>
    %127 = arith.negf %126 : vector<8x32xf32>
    %128 = math.exp %127 : vector<8x32xf32>
    %cst_46 = arith.constant 1.000000e+00 : f32
    %129 = vector.broadcast %cst_46 : f32 to vector<8x32xf32>
    %130 = arith.addf %129, %128 : vector<8x32xf32>
    %131 = arith.divf %129, %130 : vector<8x32xf32>
    %132 = arith.mulf %123, %102 : vector<8x32xf32>
    %133 = arith.mulf %117, %125 : vector<8x32xf32>
    %134 = arith.addf %132, %133 : vector<8x32xf32>
    %135 = math.tanh %134 : vector<8x32xf32>
    %136 = arith.mulf %131, %135 : vector<8x32xf32>
    %c3_47 = arith.constant 3 : index
    %c0_48 = arith.constant 0 : index
    %c0_49 = arith.constant 0 : index
    %137 = vector.load %arg8[%c3_47, %c0_48, %c0_49] : memref<8x8x32xf32, #tpu.memory_space<vmem>>, vector<1x8x32xf32>
    %138 = vector.shape_cast %137 : vector<1x8x32xf32> to vector<8x32xf32>
    %139 = vector.shape_cast %136 : vector<8x32xf32> to vector<1x8x32xf32>
    tpu.vector_store %arg8[%c3_47, %c0_48, %c0_49], %139 {strides = array<i32>} : memref<8x8x32xf32, #tpu.memory_space<vmem>>, vector<1x8x32xf32>,
    %c4 = arith.constant 4 : index
    %c0_50 = arith.constant 0 : index
    %c0_51 = arith.constant 0 : index
    %140 = vector.load %arg7[%c4, %c0_50, %c0_51] : memref<8x8x128xf32, #tpu.memory_space<vmem>>, vector<1x8x128xf32>
    %141 = vector.shape_cast %140 : vector<1x8x128xf32> to vector<8x128xf32>
    %cst_52 = arith.constant dense<0.000000e+00> : vector<8x128xf32>
    %142 = tpu.matmul %136, %9, %cst_52 {dimension_numbers = #tpu.dot_dimension_numbers<[1], [0], [0], [1], [0, 0, 1, 1], [], []>} : vector<8x32xf32>, vector<32x128xf32>, vector<8x128xf32> -> vector<8x128xf32>
    %143 = arith.addf %141, %142 : vector<8x128xf32>
    %144 = vector.extract_strided_slice %143 {offsets = [0, 0], sizes = [8, 32], strides = [1, 1]} : vector<8x128xf32> to vector<8x32xf32>
    %145 = arith.negf %144 : vector<8x32xf32>
    %146 = math.exp %145 : vector<8x32xf32>
    %cst_53 = arith.constant 1.000000e+00 : f32
    %147 = vector.broadcast %cst_53 : f32 to vector<8x32xf32>
    %148 = arith.addf %147, %146 : vector<8x32xf32>
    %149 = arith.divf %147, %148 : vector<8x32xf32>
    %150 = vector.extract_strided_slice %143 {offsets = [0, 32], sizes = [8, 32], strides = [1, 1]} : vector<8x128xf32> to vector<8x32xf32>
    %151 = arith.negf %150 : vector<8x32xf32>
    %152 = math.exp %151 : vector<8x32xf32>
    %cst_54 = arith.constant 1.000000e+00 : f32
    %153 = vector.broadcast %cst_54 : f32 to vector<8x32xf32>
    %154 = arith.addf %153, %152 : vector<8x32xf32>
    %155 = arith.divf %153, %154 : vector<8x32xf32>
    %156 = vector.extract_strided_slice %143 {offsets = [0, 64], sizes = [8, 32], strides = [1, 1]} : vector<8x128xf32> to vector<8x32xf32>
    %157 = math.tanh %156 : vector<8x32xf32>
    %158 = vector.extract_strided_slice %143 {offsets = [0, 96], sizes = [8, 32], strides = [1, 1]} : vector<8x128xf32> to vector<8x32xf32>
    %159 = arith.negf %158 : vector<8x32xf32>
    %160 = math.exp %159 : vector<8x32xf32>
    %cst_55 = arith.constant 1.000000e+00 : f32
    %161 = vector.broadcast %cst_55 : f32 to vector<8x32xf32>
    %162 = arith.addf %161, %160 : vector<8x32xf32>
    %163 = arith.divf %161, %162 : vector<8x32xf32>
    %164 = arith.mulf %155, %134 : vector<8x32xf32>
    %165 = arith.mulf %149, %157 : vector<8x32xf32>
    %166 = arith.addf %164, %165 : vector<8x32xf32>
    %167 = math.tanh %166 : vector<8x32xf32>
    %168 = arith.mulf %163, %167 : vector<8x32xf32>
    %c4_56 = arith.constant 4 : index
    %c0_57 = arith.constant 0 : index
    %c0_58 = arith.constant 0 : index
    %169 = vector.load %arg8[%c4_56, %c0_57, %c0_58] : memref<8x8x32xf32, #tpu.memory_space<vmem>>, vector<1x8x32xf32>
    %170 = vector.shape_cast %169 : vector<1x8x32xf32> to vector<8x32xf32>
    %171 = vector.shape_cast %168 : vector<8x32xf32> to vector<1x8x32xf32>
    tpu.vector_store %arg8[%c4_56, %c0_57, %c0_58], %171 {strides = array<i32>} : memref<8x8x32xf32, #tpu.memory_space<vmem>>, vector<1x8x32xf32>,
    %c5 = arith.constant 5 : index
    %c0_59 = arith.constant 0 : index
    %c0_60 = arith.constant 0 : index
    %172 = vector.load %arg7[%c5, %c0_59, %c0_60] : memref<8x8x128xf32, #tpu.memory_space<vmem>>, vector<1x8x128xf32>
    %173 = vector.shape_cast %172 : vector<1x8x128xf32> to vector<8x128xf32>
    %cst_61 = arith.constant dense<0.000000e+00> : vector<8x128xf32>
    %174 = tpu.matmul %168, %9, %cst_61 {dimension_numbers = #tpu.dot_dimension_numbers<[1], [0], [0], [1], [0, 0, 1, 1], [], []>} : vector<8x32xf32>, vector<32x128xf32>, vector<8x128xf32> -> vector<8x128xf32>
    %175 = arith.addf %173, %174 : vector<8x128xf32>
    %176 = vector.extract_strided_slice %175 {offsets = [0, 0], sizes = [8, 32], strides = [1, 1]} : vector<8x128xf32> to vector<8x32xf32>
    %177 = arith.negf %176 : vector<8x32xf32>
    %178 = math.exp %177 : vector<8x32xf32>
    %cst_62 = arith.constant 1.000000e+00 : f32
    %179 = vector.broadcast %cst_62 : f32 to vector<8x32xf32>
    %180 = arith.addf %179, %178 : vector<8x32xf32>
    %181 = arith.divf %179, %180 : vector<8x32xf32>
    %182 = vector.extract_strided_slice %175 {offsets = [0, 32], sizes = [8, 32], strides = [1, 1]} : vector<8x128xf32> to vector<8x32xf32>
    %183 = arith.negf %182 : vector<8x32xf32>
    %184 = math.exp %183 : vector<8x32xf32>
    %cst_63 = arith.constant 1.000000e+00 : f32
    %185 = vector.broadcast %cst_63 : f32 to vector<8x32xf32>
    %186 = arith.addf %185, %184 : vector<8x32xf32>
    %187 = arith.divf %185, %186 : vector<8x32xf32>
    %188 = vector.extract_strided_slice %175 {offsets = [0, 64], sizes = [8, 32], strides = [1, 1]} : vector<8x128xf32> to vector<8x32xf32>
    %189 = math.tanh %188 : vector<8x32xf32>
    %190 = vector.extract_strided_slice %175 {offsets = [0, 96], sizes = [8, 32], strides = [1, 1]} : vector<8x128xf32> to vector<8x32xf32>
    %191 = arith.negf %190 : vector<8x32xf32>
    %192 = math.exp %191 : vector<8x32xf32>
    %cst_64 = arith.constant 1.000000e+00 : f32
    %193 = vector.broadcast %cst_64 : f32 to vector<8x32xf32>
    %194 = arith.addf %193, %192 : vector<8x32xf32>
    %195 = arith.divf %193, %194 : vector<8x32xf32>
    %196 = arith.mulf %187, %166 : vector<8x32xf32>
    %197 = arith.mulf %181, %189 : vector<8x32xf32>
    %198 = arith.addf %196, %197 : vector<8x32xf32>
    %199 = math.tanh %198 : vector<8x32xf32>
    %200 = arith.mulf %195, %199 : vector<8x32xf32>
    %c5_65 = arith.constant 5 : index
    %c0_66 = arith.constant 0 : index
    %c0_67 = arith.constant 0 : index
    %201 = vector.load %arg8[%c5_65, %c0_66, %c0_67] : memref<8x8x32xf32, #tpu.memory_space<vmem>>, vector<1x8x32xf32>
    %202 = vector.shape_cast %201 : vector<1x8x32xf32> to vector<8x32xf32>
    %203 = vector.shape_cast %200 : vector<8x32xf32> to vector<1x8x32xf32>
    tpu.vector_store %arg8[%c5_65, %c0_66, %c0_67], %203 {strides = array<i32>} : memref<8x8x32xf32, #tpu.memory_space<vmem>>, vector<1x8x32xf32>,
    %c6 = arith.constant 6 : index
    %c0_68 = arith.constant 0 : index
    %c0_69 = arith.constant 0 : index
    %204 = vector.load %arg7[%c6, %c0_68, %c0_69] : memref<8x8x128xf32, #tpu.memory_space<vmem>>, vector<1x8x128xf32>
    %205 = vector.shape_cast %204 : vector<1x8x128xf32> to vector<8x128xf32>
    %cst_70 = arith.constant dense<0.000000e+00> : vector<8x128xf32>
    %206 = tpu.matmul %200, %9, %cst_70 {dimension_numbers = #tpu.dot_dimension_numbers<[1], [0], [0], [1], [0, 0, 1, 1], [], []>} : vector<8x32xf32>, vector<32x128xf32>, vector<8x128xf32> -> vector<8x128xf32>
    %207 = arith.addf %205, %206 : vector<8x128xf32>
    %208 = vector.extract_strided_slice %207 {offsets = [0, 0], sizes = [8, 32], strides = [1, 1]} : vector<8x128xf32> to vector<8x32xf32>
    %209 = arith.negf %208 : vector<8x32xf32>
    %210 = math.exp %209 : vector<8x32xf32>
    %cst_71 = arith.constant 1.000000e+00 : f32
    %211 = vector.broadcast %cst_71 : f32 to vector<8x32xf32>
    %212 = arith.addf %211, %210 : vector<8x32xf32>
    %213 = arith.divf %211, %212 : vector<8x32xf32>
    %214 = vector.extract_strided_slice %207 {offsets = [0, 32], sizes = [8, 32], strides = [1, 1]} : vector<8x128xf32> to vector<8x32xf32>
    %215 = arith.negf %214 : vector<8x32xf32>
    %216 = math.exp %215 : vector<8x32xf32>
    %cst_72 = arith.constant 1.000000e+00 : f32
    %217 = vector.broadcast %cst_72 : f32 to vector<8x32xf32>
    %218 = arith.addf %217, %216 : vector<8x32xf32>
    %219 = arith.divf %217, %218 : vector<8x32xf32>
    %220 = vector.extract_strided_slice %207 {offsets = [0, 64], sizes = [8, 32], strides = [1, 1]} : vector<8x128xf32> to vector<8x32xf32>
    %221 = math.tanh %220 : vector<8x32xf32>
    %222 = vector.extract_strided_slice %207 {offsets = [0, 96], sizes = [8, 32], strides = [1, 1]} : vector<8x128xf32> to vector<8x32xf32>
    %223 = arith.negf %222 : vector<8x32xf32>
    %224 = math.exp %223 : vector<8x32xf32>
    %cst_73 = arith.constant 1.000000e+00 : f32
    %225 = vector.broadcast %cst_73 : f32 to vector<8x32xf32>
    %226 = arith.addf %225, %224 : vector<8x32xf32>
    %227 = arith.divf %225, %226 : vector<8x32xf32>
    %228 = arith.mulf %219, %198 : vector<8x32xf32>
    %229 = arith.mulf %213, %221 : vector<8x32xf32>
    %230 = arith.addf %228, %229 : vector<8x32xf32>
    %231 = math.tanh %230 : vector<8x32xf32>
    %232 = arith.mulf %227, %231 : vector<8x32xf32>
    %c6_74 = arith.constant 6 : index
    %c0_75 = arith.constant 0 : index
    %c0_76 = arith.constant 0 : index
    %233 = vector.load %arg8[%c6_74, %c0_75, %c0_76] : memref<8x8x32xf32, #tpu.memory_space<vmem>>, vector<1x8x32xf32>
    %234 = vector.shape_cast %233 : vector<1x8x32xf32> to vector<8x32xf32>
    %235 = vector.shape_cast %232 : vector<8x32xf32> to vector<1x8x32xf32>
    tpu.vector_store %arg8[%c6_74, %c0_75, %c0_76], %235 {strides = array<i32>} : memref<8x8x32xf32, #tpu.memory_space<vmem>>, vector<1x8x32xf32>,
    %c7 = arith.constant 7 : index
    %c0_77 = arith.constant 0 : index
    %c0_78 = arith.constant 0 : index
    %236 = vector.load %arg7[%c7, %c0_77, %c0_78] : memref<8x8x128xf32, #tpu.memory_space<vmem>>, vector<1x8x128xf32>
    %237 = vector.shape_cast %236 : vector<1x8x128xf32> to vector<8x128xf32>
    %cst_79 = arith.constant dense<0.000000e+00> : vector<8x128xf32>
    %238 = tpu.matmul %232, %9, %cst_79 {dimension_numbers = #tpu.dot_dimension_numbers<[1], [0], [0], [1], [0, 0, 1, 1], [], []>} : vector<8x32xf32>, vector<32x128xf32>, vector<8x128xf32> -> vector<8x128xf32>
    %239 = arith.addf %237, %238 : vector<8x128xf32>
    %240 = vector.extract_strided_slice %239 {offsets = [0, 0], sizes = [8, 32], strides = [1, 1]} : vector<8x128xf32> to vector<8x32xf32>
    %241 = arith.negf %240 : vector<8x32xf32>
    %242 = math.exp %241 : vector<8x32xf32>
    %cst_80 = arith.constant 1.000000e+00 : f32
    %243 = vector.broadcast %cst_80 : f32 to vector<8x32xf32>
    %244 = arith.addf %243, %242 : vector<8x32xf32>
    %245 = arith.divf %243, %244 : vector<8x32xf32>
    %246 = vector.extract_strided_slice %239 {offsets = [0, 32], sizes = [8, 32], strides = [1, 1]} : vector<8x128xf32> to vector<8x32xf32>
    %247 = arith.negf %246 : vector<8x32xf32>
    %248 = math.exp %247 : vector<8x32xf32>
    %cst_81 = arith.constant 1.000000e+00 : f32
    %249 = vector.broadcast %cst_81 : f32 to vector<8x32xf32>
    %250 = arith.addf %249, %248 : vector<8x32xf32>
    %251 = arith.divf %249, %250 : vector<8x32xf32>
    %252 = vector.extract_strided_slice %239 {offsets = [0, 64], sizes = [8, 32], strides = [1, 1]} : vector<8x128xf32> to vector<8x32xf32>
    %253 = math.tanh %252 : vector<8x32xf32>
    %254 = vector.extract_strided_slice %239 {offsets = [0, 96], sizes = [8, 32], strides = [1, 1]} : vector<8x128xf32> to vector<8x32xf32>
    %255 = arith.negf %254 : vector<8x32xf32>
    %256 = math.exp %255 : vector<8x32xf32>
    %cst_82 = arith.constant 1.000000e+00 : f32
    %257 = vector.broadcast %cst_82 : f32 to vector<8x32xf32>
    %258 = arith.addf %257, %256 : vector<8x32xf32>
    %259 = arith.divf %257, %258 : vector<8x32xf32>
    %260 = arith.mulf %251, %230 : vector<8x32xf32>
    %261 = arith.mulf %245, %253 : vector<8x32xf32>
    %262 = arith.addf %260, %261 : vector<8x32xf32>
    %263 = math.tanh %262 : vector<8x32xf32>
    %264 = arith.mulf %259, %263 : vector<8x32xf32>
    %c7_83 = arith.constant 7 : index
    %c0_84 = arith.constant 0 : index
    %c0_85 = arith.constant 0 : index
    %265 = vector.load %arg8[%c7_83, %c0_84, %c0_85] : memref<8x8x32xf32, #tpu.memory_space<vmem>>, vector<1x8x32xf32>
    %266 = vector.shape_cast %265 : vector<1x8x32xf32> to vector<8x32xf32>
    %267 = vector.shape_cast %264 : vector<8x32xf32> to vector<1x8x32xf32>
    tpu.vector_store %arg8[%c7_83, %c0_84, %c0_85], %267 {strides = array<i32>} : memref<8x8x32xf32, #tpu.memory_space<vmem>>, vector<1x8x32xf32>,
    %c0_86 = arith.constant 0 : index
    %c0_87 = arith.constant 0 : index
    %c0_88 = arith.constant 0 : index
    %268 = vector.load %arg8[%c0_86, %c0_87, %c0_88] : memref<8x8x32xf32, #tpu.memory_space<vmem>>, vector<8x8x32xf32>
    %269 = vector.shape_cast %268 : vector<8x8x32xf32> to vector<64x32xf32>
    %c0_89 = arith.constant 0 : index
    %c0_90 = arith.constant 0 : index
    %270 = vector.load %arg4[%c0_89, %c0_90] : memref<32x128xf32, #tpu.memory_space<vmem>>, vector<32x128xf32>
    %cst_91 = arith.constant dense<0.000000e+00> : vector<64x128xf32>
    %271 = tpu.matmul %269, %270, %cst_91 {dimension_numbers = #tpu.dot_dimension_numbers<[1], [0], [0], [1], [0, 0, 1, 1], [], []>} : vector<64x32xf32>, vector<32x128xf32>, vector<64x128xf32> -> vector<64x128xf32>
    %c0_92 = arith.constant 0 : index
    %c0_93 = arith.constant 0 : index
    %272 = vector.load %arg5[%c0_92, %c0_93] : memref<1x128xf32, #tpu.memory_space<vmem>>, vector<1x128xf32>
    %273 = vector.broadcast %272 : vector<1x128xf32> to vector<64x128xf32>
    %274 = arith.addf %271, %273 : vector<64x128xf32>
    %275 = vector.shape_cast %274 : vector<64x128xf32> to vector<8x8x128xf32>
    %c0_94 = arith.constant 0 : index
    %c0_95 = arith.constant 0 : index
    %c0_96 = arith.constant 0 : index
    %276 = vector.load %arg6[%c0_94, %c0_95, %c0_96] : memref<8x8x128xf32, #tpu.memory_space<vmem>>, vector<8x8x128xf32>
    tpu.vector_store %arg6[%c0_94, %c0_95, %c0_96], %275 {strides = array<i32>} : memref<8x8x128xf32, #tpu.memory_space<vmem>>, vector<8x8x128xf32>,
    return
  }
}

</mosaic_0001>

<llo_original>
// kernel: lstm_classifier_forward.1
$region0: #{lstm_classifier_forward.1}
  #allocation0 [shape = 'u32[]', space=smem, size = 0x4, offset = 0x4, fixed_abs, tag = 'smem constant byte address 0x4 - core index']
  #allocation1 [shape = 'u32[144,128]{1,0:T(1,128)}', space=vmem, size = 0x12000, scoped, tag = 'internal scratch']
  #allocation2 [shape = 'f32[8,8,128]{2,1,0:T(8,128)}', space=vmem, size = 0x8000, scoped, tag = 'scratch operand']
  #allocation3 [shape = 'f32[8,8,32]{2,1,0:T(8,128)}', space=vmem, size = 0x8000, scoped, tag = 'scratch operand']
  %s0 = inlined_call_operand.vmem [shape: f32[8,8,16], index: 0, kind: input, shape index: {}]
  %s1 = inlined_call_operand.vmem [shape: f32[16,128], index: 1, kind: input, shape index: {}]
  %s2 = inlined_call_operand.vmem [shape: f32[32,128], index: 2, kind: input, shape index: {}]
  %s3 = inlined_call_operand.vmem [shape: f32[1,128], index: 3, kind: input, shape index: {}]
  %s4 = inlined_call_operand.vmem [shape: f32[32,128], index: 4, kind: input, shape index: {}]
  %s5 = inlined_call_operand.vmem [shape: f32[1,128], index: 5, kind: input, shape index: {}]
  %s6 = inlined_call_operand.vmem [shape: f32[8,8,128], index: 6, kind: output, shape index: {}]
  %s7 = sld [smem:[#allocation0]]
  $region34: #{lstm_classifier_forward.1} parent=0
    _
  %s9 = ssub.s32 1, %s7
  %s10 = scalar_select 0, %s9, %s7
  // Predicated region
  $region2: #{lstm_classifier_forward.1} parent=0 // pred_check
    _
  $region3: #{lstm_classifier_forward.1} parent=0 // pred_check_branch
    %12 = sbr.rel (0) target = $region5
  $region4: #{lstm_classifier_forward.1} parent=0 // pred_region
    _
  $region5: #{lstm_classifier_forward.1} parent=0 // pred_fallthru
    _
  // Predicated region
  $region6: #{lstm_classifier_forward.1} parent=0 // pred_check
    _
  $region7: #{lstm_classifier_forward.1} parent=0 // pred_check_branch
    %14 = sbr.rel (0) target = $region9
  $region8: #{lstm_classifier_forward.1} parent=0 // pred_region
    _
  $region9: #{lstm_classifier_forward.1} parent=0 // pred_fallthru
    _
  // Predicated region
  $region10: #{lstm_classifier_forward.1} parent=0 // pred_check
    _
  $region11: #{lstm_classifier_forward.1} parent=0 // pred_check_branch
    %16 = sbr.rel (0) target = $region13
  $region12: #{lstm_classifier_forward.1} parent=0 // pred_region
    _
  $region13: #{lstm_classifier_forward.1} parent=0 // pred_fallthru
    _
  // Predicated region
  $region14: #{lstm_classifier_forward.1} parent=0 // pred_check
    _
  $region15: #{lstm_classifier_forward.1} parent=0 // pred_check_branch
    %18 = sbr.rel (0) target = $region17
  $region16: #{lstm_classifier_forward.1} parent=0 // pred_region
    _
  $region17: #{lstm_classifier_forward.1} parent=0 // pred_fallthru
    _
  // Predicated region
  $region18: #{lstm_classifier_forward.1} parent=0 // pred_check
    _
  $region19: #{lstm_classifier_forward.1} parent=0 // pred_check_branch
    %20 = sbr.rel (0) target = $region21
  $region20: #{lstm_classifier_forward.1} parent=0 // pred_region
    _
  $region21: #{lstm_classifier_forward.1} parent=0 // pred_fallthru
    _
  // Predicated region
  $region22: #{lstm_classifier_forward.1} parent=0 // pred_check
    _
  $region23: #{lstm_classifier_forward.1} parent=0 // pred_check_branch
    %22 = sbr.rel (0) target = $region25
  $region24: #{lstm_classifier_forward.1} parent=0 // pred_region
    _
  $region25: #{lstm_classifier_forward.1} parent=0 // pred_fallthru
    _
  %v23 = vld [vmem:[%s0] sm:$0xff]
  %v24 = vld [vmem:[%s0 + $0x8] sm:$0xff]
  %v25 = vld [vmem:[%s0 + $0x10] sm:$0xff]
  %v26 = vld [vmem:[%s0 + $0x18] sm:$0xff]
  %v27 = vld [vmem:[%s0 + $0x20] sm:$0xff]
  %v28 = vld [vmem:[%s0 + $0x28] sm:$0xff]
  %v29 = vld [vmem:[%s0 + $0x30] sm:$0xff]
  %v30 = vld [vmem:[%s0 + $0x38] sm:$0xff]
  %v31 = vld [vmem:[%s1] sm:$0xff]
  %v32 = vld [vmem:[%s1 + $0x8] sm:$0xff]
  %v33 = vld [vmem:[%s3] sm:$0x1]
  %v35 = vlaneseq
  %v36 = vshrl.u32 %v35, 7
  %v37 = vsub.s32 0, %v36
  %v38 = vrot.slane %v33, %v37
  %vm40 = vcmask 130048
  %v42 = vsel %vm40, %v23, 0
  %v45 = vsel %vm40, %v24, 0
  %v48 = vsel %vm40, %v25, 0
  %v51 = vsel %vm40, %v26, 0
  %v54 = vsel %vm40, %v27, 0
  %v57 = vsel %vm40, %v28, 0
  %v60 = vsel %vm40, %v29, 0
  %v63 = vsel %vm40, %v30, 0
  %65 = vmatprep.subr.mxu0 0.0
  %66 = vmatpush1.msra.mxu0 %v31
  %67 = vmatprep.subr.mxu0 0.0
  %68 = vmatpush1.msra.mxu0 %v32
  %69 = vmatprep.subr.mxu0 0.0
  %70 = vmatpush1.msra.mxu0 0.0
  %71 = vmatprep.subr.mxu0 0.0
  %72 = vmatpush1.msra.mxu0 0.0
  %73 = vmatprep.subr.mxu0 0.0
  %74 = vmatpush1.msra.mxu0 0.0
  %75 = vmatprep.subr.mxu0 0.0
  %76 = vmatpush1.msra.mxu0 0.0
  %77 = vmatprep.subr.mxu0 0.0
  %78 = vmatpush1.msra.mxu0 0.0
  %79 = vmatprep.subr.mxu0 0.0
  %80 = vmatpush1.msra.mxu0 0.0
  %81 = vmatprep.subr.mxu0 0.0
  %82 = vmatpush1.msra.mxu0 0.0
  %83 = vmatprep.subr.mxu0 0.0
  %84 = vmatpush1.msra.mxu0 0.0
  %85 = vmatprep.subr.mxu0 0.0
  %86 = vmatpush1.msra.mxu0 0.0
  %87 = vmatprep.subr.mxu0 0.0
  %88 = vmatpush1.msra.mxu0 0.0
  %89 = vmatprep.subr.mxu0 0.0
  %90 = vmatpush1.msra.mxu0 0.0
  %91 = vmatprep.subr.mxu0 0.0
  %92 = vmatpush1.msra.mxu0 0.0
  %93 = vmatprep.subr.mxu0 0.0
  %94 = vmatpush1.msra.mxu0 0.0
  %95 = vmatprep.subr.mxu0 0.0
  %96 = vmatpush1.msra.mxu0 0.0
  %97 = vmatprep.subr.mxu0 0.0
  %98 = vmatpush1.msra.mxu0 0.0
  %99 = vmatprep.subr.mxu0 0.0
  %100 = vmatpush1.msra.mxu0 0.0
  %101 = vmatprep.subr.mxu0 0.0
  %102 = vmatpush1.msra.mxu0 0.0
  %103 = vmatprep.subr.mxu0 0.0
  %104 = vmatpush1.msra.mxu0 0.0
  %105 = vmatprep.subr.mxu0 0.0
  %106 = vmatpush1.msra.mxu0 0.0
  %107 = vmatprep.subr.mxu0 0.0
  %108 = vmatpush1.msra.mxu0 0.0
  %109 = vmatprep.subr.mxu0 0.0
  %110 = vmatpush1.msra.mxu0 0.0
  %111 = vmatprep.subr.mxu0 0.0
  %112 = vmatpush1.msra.mxu0 0.0
  %113 = vmatprep.subr.mxu0 0.0
  %114 = vmatpush1.msra.mxu0 0.0
  %115 = vmatprep.subr.mxu0 0.0
  %116 = vmatpush1.msra.mxu0 0.0
  %117 = vmatprep.subr.mxu0 0.0
  %118 = vmatpush1.msra.mxu0 0.0
  %119 = vmatprep.subr.mxu0 0.0
  %120 = vmatpush1.msra.mxu0 0.0
  %121 = vmatprep.subr.mxu0 0.0
  %122 = vmatpush1.msra.mxu0 0.0
  %123 = vmatprep.subr.mxu0 0.0
  %124 = vmatpush1.msra.mxu0 0.0
  %125 = vmatprep.subr.mxu0 0.0
  %126 = vmatpush1.msra.mxu0 0.0
  %127 = vmatprep.subr.mxu0 0.0
  %128 = vmatpush1.msra.mxu0 0.0
  %129 = vmatprep.mubr.f32.mxu0 0.0
  %130 = vmatmul.mubr.f32.gmra.mrb[0].mxu0 %v42
  %v131 = vpop.f32.mrb[0].mxu0
  %v132 = vadd.f32 %v38, %v131
  %v133 = vpop.f32.mrb[0].mxu0
  %134 = vmatprep.mubr.f32.mxu0 0.0
  %135 = vmatmul.mubr.f32.gmra.mrb[0].mxu0 %v45
  %v136 = vpop.f32.mrb[0].mxu0
  %v137 = vadd.f32 %v38, %v136
  %v138 = vpop.f32.mrb[0].mxu0
  %139 = vmatprep.mubr.f32.mxu0 0.0
  %140 = vmatmul.mubr.f32.gmra.mrb[0].mxu0 %v48
  %v141 = vpop.f32.mrb[0].mxu0
  %v142 = vadd.f32 %v38, %v141
  %v143 = vpop.f32.mrb[0].mxu0
  %144 = vmatprep.mubr.f32.mxu0 0.0
  %145 = vmatmul.mubr.f32.gmra.mrb[0].mxu0 %v51
  %v146 = vpop.f32.mrb[0].mxu0
  %v147 = vadd.f32 %v38, %v146
  %v148 = vpop.f32.mrb[0].mxu0
  %149 = vmatprep.mubr.f32.mxu0 0.0
  %150 = vmatmul.mubr.f32.gmra.mrb[0].mxu0 %v54
  %v151 = vpop.f32.mrb[0].mxu0
  %v152 = vadd.f32 %v38, %v151
  %v153 = vpop.f32.mrb[0].mxu0
  %154 = vmatprep.mubr.f32.mxu0 0.0
  %155 = vmatmul.mubr.f32.gmra.mrb[0].mxu0 %v57
  %v156 = vpop.f32.mrb[0].mxu0
  %v157 = vadd.f32 %v38, %v156
  %v158 = vpop.f32.mrb[0].mxu0
  %159 = vmatprep.mubr.f32.mxu0 0.0
  %160 = vmatmul.mubr.f32.gmra.mrb[0].mxu0 %v60
  %v161 = vpop.f32.mrb[0].mxu0
  %v162 = vadd.f32 %v38, %v161
  %v163 = vpop.f32.mrb[0].mxu0
  %164 = vmatprep.mubr.f32.mxu0 0.0
  %165 = vmatmul.mubr.f32.gmra.mrb[0].mxu0 %v63
  %v166 = vpop.f32.mrb[0].mxu0
  %v167 = vadd.f32 %v38, %v166
  %v168 = vpop.f32.mrb[0].mxu0
  %169 = vdwg.mxu0
  %170 = vst [vmem:[#allocation2] sm:$0xff] %v132
  %171 = vst [vmem:[#allocation2 + $0x8] sm:$0xff] %v137
  %172 = vst [vmem:[#allocation2 + $0x10] sm:$0xff] %v142
  %173 = vst [vmem:[#allocation2 + $0x18] sm:$0xff] %v147
  %174 = vst [vmem:[#allocation2 + $0x20] sm:$0xff] %v152
  %175 = vst [vmem:[#allocation2 + $0x28] sm:$0xff] %v157
  %176 = vst [vmem:[#allocation2 + $0x30] sm:$0xff] %v162
  %177 = vst [vmem:[#allocation2 + $0x38] sm:$0xff] %v167
  %v178 = vld [vmem:[%s2] sm:$0xff]
  %v179 = vld [vmem:[%s2 + $0x8] sm:$0xff]
  %v180 = vld [vmem:[%s2 + $0x10] sm:$0xff]
  %v181 = vld [vmem:[%s2 + $0x18] sm:$0xff]
  %v182 = vld [vmem:[#allocation2] sm:$0xff]
  %vm183 = vcmask 261120
  %v185 = vsel %vm183, 0.0, 0
  %187 = vmatprep.subr.mxu0 0.0
  %188 = vmatpush1.msra.mxu0 %v178
  %189 = vmatprep.subr.mxu0 0.0
  %190 = vmatpush1.msra.mxu0 %v179
  %191 = vmatprep.subr.mxu0 0.0
  %192 = vmatpush1.msra.mxu0 %v180
  %193 = vmatprep.subr.mxu0 0.0
  %194 = vmatpush1.msra.mxu0 %v181
  %195 = vmatprep.subr.mxu0 0.0
  %196 = vmatpush1.msra.mxu0 0.0
  %197 = vmatprep.subr.mxu0 0.0
  %198 = vmatpush1.msra.mxu0 0.0
  %199 = vmatprep.subr.mxu0 0.0
  %200 = vmatpush1.msra.mxu0 0.0
  %201 = vmatprep.subr.mxu0 0.0
  %202 = vmatpush1.msra.mxu0 0.0
  %203 = vmatprep.subr.mxu0 0.0
  %204 = vmatpush1.msra.mxu0 0.0
  %205 = vmatprep.subr.mxu0 0.0
  %206 = vmatpush1.msra.mxu0 0.0
  %207 = vmatprep.subr.mxu0 0.0
  %208 = vmatpush1.msra.mxu0 0.0
  %209 = vmatprep.subr.mxu0 0.0
  %210 = vmatpush1.msra.mxu0 0.0
  %211 = vmatprep.subr.mxu0 0.0
  %212 = vmatpush1.msra.mxu0 0.0
  %213 = vmatprep.subr.mxu0 0.0
  %214 = vmatpush1.msra.mxu0 0.0
  %215 = vmatprep.subr.mxu0 0.0
  %216 = vmatpush1.msra.mxu0 0.0
  %217 = vmatprep.subr.mxu0 0.0
  %218 = vmatpush1.msra.mxu0 0.0
  %219 = vmatprep.subr.mxu0 0.0
  %220 = vmatpush1.msra.mxu0 0.0
  %221 = vmatprep.subr.mxu0 0.0
  %222 = vmatpush1.msra.mxu0 0.0
  %223 = vmatprep.subr.mxu0 0.0
  %224 = vmatpush1.msra.mxu0 0.0
  %225 = vmatprep.subr.mxu0 0.0
  %226 = vmatpush1.msra.mxu0 0.0
  %227 = vmatprep.subr.mxu0 0.0
  %228 = vmatpush1.msra.mxu0 0.0
  %229 = vmatprep.subr.mxu0 0.0
  %230 = vmatpush1.msra.mxu0 0.0
  %231 = vmatprep.subr.mxu0 0.0
  %232 = vmatpush1.msra.mxu0 0.0
  %233 = vmatprep.subr.mxu0 0.0
  %234 = vmatpush1.msra.mxu0 0.0
  %235 = vmatprep.subr.mxu0 0.0
  %236 = vmatpush1.msra.mxu0 0.0
  %237 = vmatprep.subr.mxu0 0.0
  %238 = vmatpush1.msra.mxu0 0.0
  %239 = vmatprep.subr.mxu0 0.0
  %240 = vmatpush1.msra.mxu0 0.0
  %241 = vmatprep.subr.mxu0 0.0
  %242 = vmatpush1.msra.mxu0 0.0
  %243 = vmatprep.subr.mxu0 0.0
  %244 = vmatpush1.msra.mxu0 0.0
  %245 = vmatprep.subr.mxu0 0.0
  %246 = vmatpush1.msra.mxu0 0.0
  %247 = vmatprep.subr.mxu0 0.0
  %248 = vmatpush1.msra.mxu0 0.0
  %249 = vmatprep.subr.mxu0 0.0
  %250 = vmatpush1.msra.mxu0 0.0
  %251 = vmatprep.mubr.f32.mxu0 0.0
  %252 = vmatmul.mubr.f32.gmra.mrb[0].mxu0 %v185
  %v253 = vpop.f32.mrb[0].mxu0
  %v254 = vadd.f32 0.0, %v253
  %v255 = vpop.f32.mrb[0].mxu0
  %256 = vdwg.mxu0
  %v257 = vadd.f32 %v182, %v254
  %v258 = vxor.u32 %v257, 2147483648
  %v259 = vmul.f32 %v258, 1.442695
  %v260 = vpow.pop %v259
  %v261 = vadd.f32 %v260, 1.0
  %v262 = vrcp.pop %v261
  %v263 = vmul.f32 1.0, %v262
  %v264 = vtanh.pop %v257
  %v265 = vmul.f32 %v263, 0.0
  %267 = vrot.lane.b32.xlu0 %v264, 64
  %v268 = vpop.permute.xlu0 %267
  %v270 = vmul.f32 %v263, %v268
  %272 = vrot.lane.b32.xlu0 %v270, 32
  %v273 = vpop.permute.xlu0 %272
  %v275 = vadd.f32 %v265, %v273
  %v276 = vtanh.pop %v275
  %278 = vrot.lane.b32.xlu0 %v276, 64
  %v279 = vpop.permute.xlu0 %278
  %v281 = vmul.f32 %v263, %v279
  %283 = vrot.lane.b32.xlu0 %v281, 32
  %v284 = vpop.permute.xlu0 %283
  %286 = vst.msk [vmem:[#allocation3] sm:$0xff] %vm183, %v284
  %s287 = scalar_lea.vmem [#allocation2], 8
  %v288 = vld [vmem:[%s287] sm:$0xff]
  %v289 = vsel %vm183, %v284, 0
  %291 = vmatprep.subr.mxu0 0.0
  %292 = vmatpush1.msra.mxu0 %v178
  %293 = vmatprep.subr.mxu0 0.0
  %294 = vmatpush1.msra.mxu0 %v179
  %295 = vmatprep.subr.mxu0 0.0
  %296 = vmatpush1.msra.mxu0 %v180
  %297 = vmatprep.subr.mxu0 0.0
  %298 = vmatpush1.msra.mxu0 %v181
  %299 = vmatprep.subr.mxu0 0.0
  %300 = vmatpush1.msra.mxu0 0.0
  %301 = vmatprep.subr.mxu0 0.0
  %302 = vmatpush1.msra.mxu0 0.0
  %303 = vmatprep.subr.mxu0 0.0
  %304 = vmatpush1.msra.mxu0 0.0
  %305 = vmatprep.subr.mxu0 0.0
  %306 = vmatpush1.msra.mxu0 0.0
  %307 = vmatprep.subr.mxu0 0.0
  %308 = vmatpush1.msra.mxu0 0.0
  %309 = vmatprep.subr.mxu0 0.0
  %310 = vmatpush1.msra.mxu0 0.0
  %311 = vmatprep.subr.mxu0 0.0
  %312 = vmatpush1.msra.mxu0 0.0
  %313 = vmatprep.subr.mxu0 0.0
  %314 = vmatpush1.msra.mxu0 0.0
  %315 = vmatprep.subr.mxu0 0.0
  %316 = vmatpush1.msra.mxu0 0.0
  %317 = vmatprep.subr.mxu0 0.0
  %318 = vmatpush1.msra.mxu0 0.0
  %319 = vmatprep.subr.mxu0 0.0
  %320 = vmatpush1.msra.mxu0 0.0
  %321 = vmatprep.subr.mxu0 0.0
  %322 = vmatpush1.msra.mxu0 0.0
  %323 = vmatprep.subr.mxu0 0.0
  %324 = vmatpush1.msra.mxu0 0.0
  %325 = vmatprep.subr.mxu0 0.0
  %326 = vmatpush1.msra.mxu0 0.0
  %327 = vmatprep.subr.mxu0 0.0
  %328 = vmatpush1.msra.mxu0 0.0
  %329 = vmatprep.subr.mxu0 0.0
  %330 = vmatpush1.msra.mxu0 0.0
  %331 = vmatprep.subr.mxu0 0.0
  %332 = vmatpush1.msra.mxu0 0.0
  %333 = vmatprep.subr.mxu0 0.0
  %334 = vmatpush1.msra.mxu0 0.0
  %335 = vmatprep.subr.mxu0 0.0
  %336 = vmatpush1.msra.mxu0 0.0
  %337 = vmatprep.subr.mxu0 0.0
  %338 = vmatpush1.msra.mxu0 0.0
  %339 = vmatprep.subr.mxu0 0.0
  %340 = vmatpush1.msra.mxu0 0.0
  %341 = vmatprep.subr.mxu0 0.0
  %342 = vmatpush1.msra.mxu0 0.0
  %343 = vmatprep.subr.mxu0 0.0
  %344 = vmatpush1.msra.mxu0 0.0
  %345 = vmatprep.subr.mxu0 0.0
  %346 = vmatpush1.msra.mxu0 0.0
  %347 = vmatprep.subr.mxu0 0.0
  %348 = vmatpush1.msra.mxu0 0.0
  %349 = vmatprep.subr.mxu0 0.0
  %350 = vmatpush1.msra.mxu0 0.0
  %351 = vmatprep.subr.mxu0 0.0
  %352 = vmatpush1.msra.mxu0 0.0
  %353 = vmatprep.subr.mxu0 0.0
  %354 = vmatpush1.msra.mxu0 0.0
  %355 = vmatprep.mubr.f32.mxu0 0.0
  %356 = vmatmul.mubr.f32.gmra.mrb[0].mxu0 %v289
  %v357 = vpop.f32.mrb[0].mxu0
  %v358 = vadd.f32 0.0, %v357
  %v359 = vpop.f32.mrb[0].mxu0
  %360 = vdwg.mxu0
  %v361 = vadd.f32 %v288, %v358
  %v362 = vxor.u32 %v361, 2147483648
  %v363 = vmul.f32 %v362, 1.442695
  %v364 = vpow.pop %v363
  %v365 = vadd.f32 %v364, 1.0
  %v366 = vrcp.pop %v365
  %v367 = vmul.f32 1.0, %v366
  %v368 = vtanh.pop %v361
  %v369 = vmul.f32 %v367, %v275
  %371 = vrot.lane.b32.xlu0 %v368, 64
  %v372 = vpop.permute.xlu0 %371
  %v374 = vmul.f32 %v367, %v372
  %376 = vrot.lane.b32.xlu0 %v374, 32
  %v377 = vpop.permute.xlu0 %376
  %v379 = vadd.f32 %v369, %v377
  %v380 = vtanh.pop %v379
  %382 = vrot.lane.b32.xlu0 %v380, 64
  %v383 = vpop.permute.xlu0 %382
  %v385 = vmul.f32 %v367, %v383
  %387 = vrot.lane.b32.xlu0 %v385, 32
  %v388 = vpop.permute.xlu0 %387
  %s390 = scalar_lea.vmem [#allocation3], 8
  %391 = vst.msk [vmem:[%s390] sm:$0xff] %vm183, %v388
  %s392 = scalar_lea.vmem [#allocation2], 16
  %v393 = vld [vmem:[%s392] sm:$0xff]
  %v394 = vsel %vm183, %v388, 0
  %396 = vmatprep.subr.mxu0 0.0
  %397 = vmatpush1.msra.mxu0 %v178
  %398 = vmatprep.subr.mxu0 0.0
  %399 = vmatpush1.msra.mxu0 %v179
  %400 = vmatprep.subr.mxu0 0.0
  %401 = vmatpush1.msra.mxu0 %v180
  %402 = vmatprep.subr.mxu0 0.0
  %403 = vmatpush1.msra.mxu0 %v181
  %404 = vmatprep.subr.mxu0 0.0
  %405 = vmatpush1.msra.mxu0 0.0
  %406 = vmatprep.subr.mxu0 0.0
  %407 = vmatpush1.msra.mxu0 0.0
  %408 = vmatprep.subr.mxu0 0.0
  %409 = vmatpush1.msra.mxu0 0.0
  %410 = vmatprep.subr.mxu0 0.0
  %411 = vmatpush1.msra.mxu0 0.0
  %412 = vmatprep.subr.mxu0 0.0
  %413 = vmatpush1.msra.mxu0 0.0
  %414 = vmatprep.subr.mxu0 0.0
  %415 = vmatpush1.msra.mxu0 0.0
  %416 = vmatprep.subr.mxu0 0.0
  %417 = vmatpush1.msra.mxu0 0.0
  %418 = vmatprep.subr.mxu0 0.0
  %419 = vmatpush1.msra.mxu0 0.0
  %420 = vmatprep.subr.mxu0 0.0
  %421 = vmatpush1.msra.mxu0 0.0
  %422 = vmatprep.subr.mxu0 0.0
  %423 = vmatpush1.msra.mxu0 0.0
  %424 = vmatprep.subr.mxu0 0.0
  %425 = vmatpush1.msra.mxu0 0.0
  %426 = vmatprep.subr.mxu0 0.0
  %427 = vmatpush1.msra.mxu0 0.0
  %428 = vmatprep.subr.mxu0 0.0
  %429 = vmatpush1.msra.mxu0 0.0
  %430 = vmatprep.subr.mxu0 0.0
  %431 = vmatpush1.msra.mxu0 0.0
  %432 = vmatprep.subr.mxu0 0.0
  %433 = vmatpush1.msra.mxu0 0.0
  %434 = vmatprep.subr.mxu0 0.0
  %435 = vmatpush1.msra.mxu0 0.0
  %436 = vmatprep.subr.mxu0 0.0
  %437 = vmatpush1.msra.mxu0 0.0
  %438 = vmatprep.subr.mxu0 0.0
  %439 = vmatpush1.msra.mxu0 0.0
  %440 = vmatprep.subr.mxu0 0.0
  %441 = vmatpush1.msra.mxu0 0.0
  %442 = vmatprep.subr.mxu0 0.0
  %443 = vmatpush1.msra.mxu0 0.0
  %444 = vmatprep.subr.mxu0 0.0
  %445 = vmatpush1.msra.mxu0 0.0
  %446 = vmatprep.subr.mxu0 0.0
  %447 = vmatpush1.msra.mxu0 0.0
  %448 = vmatprep.subr.mxu0 0.0
  %449 = vmatpush1.msra.mxu0 0.0
  %450 = vmatprep.subr.mxu0 0.0
  %451 = vmatpush1.msra.mxu0 0.0
  %452 = vmatprep.subr.mxu0 0.0
  %453 = vmatpush1.msra.mxu0 0.0
  %454 = vmatprep.subr.mxu0 0.0
  %455 = vmatpush1.msra.mxu0 0.0
  %456 = vmatprep.subr.mxu0 0.0
  %457 = vmatpush1.msra.mxu0 0.0
  %458 = vmatprep.subr.mxu0 0.0
  %459 = vmatpush1.msra.mxu0 0.0
  %460 = vmatprep.mubr.f32.mxu0 0.0
  %461 = vmatmul.mubr.f32.gmra.mrb[0].mxu0 %v394
  %v462 = vpop.f32.mrb[0].mxu0
  %v463 = vadd.f32 0.0, %v462
  %v464 = vpop.f32.mrb[0].mxu0
  %465 = vdwg.mxu0
  %v466 = vadd.f32 %v393, %v463
  %v467 = vxor.u32 %v466, 2147483648
  %v468 = vmul.f32 %v467, 1.442695
  %v469 = vpow.pop %v468
  %v470 = vadd.f32 %v469, 1.0
  %v471 = vrcp.pop %v470
  %v472 = vmul.f32 1.0, %v471
  %v473 = vtanh.pop %v466
  %v474 = vmul.f32 %v472, %v379
  %476 = vrot.lane.b32.xlu0 %v473, 64
  %v477 = vpop.permute.xlu0 %476
  %v479 = vmul.f32 %v472, %v477
  %481 = vrot.lane.b32.xlu0 %v479, 32
  %v482 = vpop.permute.xlu0 %481
  %v484 = vadd.f32 %v474, %v482
  %v485 = vtanh.pop %v484
  %487 = vrot.lane.b32.xlu0 %v485, 64
  %v488 = vpop.permute.xlu0 %487
  %v490 = vmul.f32 %v472, %v488
  %492 = vrot.lane.b32.xlu0 %v490, 32
  %v493 = vpop.permute.xlu0 %492
  %s495 = scalar_lea.vmem [#allocation3], 16
  %496 = vst.msk [vmem:[%s495] sm:$0xff] %vm183, %v493
  %s497 = scalar_lea.vmem [#allocation2], 24
  %v498 = vld [vmem:[%s497] sm:$0xff]
  %v499 = vsel %vm183, %v493, 0
  %501 = vmatprep.subr.mxu0 0.0
  %502 = vmatpush1.msra.mxu0 %v178
  %503 = vmatprep.subr.mxu0 0.0
  %504 = vmatpush1.msra.mxu0 %v179
  %505 = vmatprep.subr.mxu0 0.0
  %506 = vmatpush1.msra.mxu0 %v180
  %507 = vmatprep.subr.mxu0 0.0
  %508 = vmatpush1.msra.mxu0 %v181
  %509 = vmatprep.subr.mxu0 0.0
  %510 = vmatpush1.msra.mxu0 0.0
  %511 = vmatprep.subr.mxu0 0.0
  %512 = vmatpush1.msra.mxu0 0.0
  %513 = vmatprep.subr.mxu0 0.0
  %514 = vmatpush1.msra.mxu0 0.0
  %515 = vmatprep.subr.mxu0 0.0
  %516 = vmatpush1.msra.mxu0 0.0
  %517 = vmatprep.subr.mxu0 0.0
  %518 = vmatpush1.msra.mxu0 0.0
  %519 = vmatprep.subr.mxu0 0.0
  %520 = vmatpush1.msra.mxu0 0.0
  %521 = vmatprep.subr.mxu0 0.0
  %522 = vmatpush1.msra.mxu0 0.0
  %523 = vmatprep.subr.mxu0 0.0
  %524 = vmatpush1.msra.mxu0 0.0
  %525 = vmatprep.subr.mxu0 0.0
  %526 = vmatpush1.msra.mxu0 0.0
  %527 = vmatprep.subr.mxu0 0.0
  %528 = vmatpush1.msra.mxu0 0.0
  %529 = vmatprep.subr.mxu0 0.0
  %530 = vmatpush1.msra.mxu0 0.0
  %531 = vmatprep.subr.mxu0 0.0
  %532 = vmatpush1.msra.mxu0 0.0
  %533 = vmatprep.subr.mxu0 0.0
  %534 = vmatpush1.msra.mxu0 0.0
  %535 = vmatprep.subr.mxu0 0.0
  %536 = vmatpush1.msra.mxu0 0.0
  %537 = vmatprep.subr.mxu0 0.0
  %538 = vmatpush1.msra.mxu0 0.0
  %539 = vmatprep.subr.mxu0 0.0
  %540 = vmatpush1.msra.mxu0 0.0
  %541 = vmatprep.subr.mxu0 0.0
  %542 = vmatpush1.msra.mxu0 0.0
  %543 = vmatprep.subr.mxu0 0.0
  %544 = vmatpush1.msra.mxu0 0.0
  %545 = vmatprep.subr.mxu0 0.0
  %546 = vmatpush1.msra.mxu0 0.0
  %547 = vmatprep.subr.mxu0 0.0
  %548 = vmatpush1.msra.mxu0 0.0
  %549 = vmatprep.subr.mxu0 0.0
  %550 = vmatpush1.msra.mxu0 0.0
  %551 = vmatprep.subr.mxu0 0.0
  %552 = vmatpush1.msra.mxu0 0.0
  %553 = vmatprep.subr.mxu0 0.0
  %554 = vmatpush1.msra.mxu0 0.0
  %555 = vmatprep.subr.mxu0 0.0
  %556 = vmatpush1.msra.mxu0 0.0
  %557 = vmatprep.subr.mxu0 0.0
  %558 = vmatpush1.msra.mxu0 0.0
  %559 = vmatprep.subr.mxu0 0.0
  %560 = vmatpush1.msra.mxu0 0.0
  %561 = vmatprep.subr.mxu0 0.0
  %562 = vmatpush1.msra.mxu0 0.0
  %563 = vmatprep.subr.mxu0 0.0
  %564 = vmatpush1.msra.mxu0 0.0
  %565 = vmatprep.mubr.f32.mxu0 0.0
  %566 = vmatmul.mubr.f32.gmra.mrb[0].mxu0 %v499
  %v567 = vpop.f32.mrb[0].mxu0
  %v568 = vadd.f32 0.0, %v567
  %v569 = vpop.f32.mrb[0].mxu0
  %570 = vdwg.mxu0
  %v571 = vadd.f32 %v498, %v568
  %v572 = vxor.u32 %v571, 2147483648
  %v573 = vmul.f32 %v572, 1.442695
  %v574 = vpow.pop %v573
  %v575 = vadd.f32 %v574, 1.0
  %v576 = vrcp.pop %v575
  %v577 = vmul.f32 1.0, %v576
  %v578 = vtanh.pop %v571
  %v579 = vmul.f32 %v577, %v484
  %581 = vrot.lane.b32.xlu0 %v578, 64
  %v582 = vpop.permute.xlu0 %581
  %v584 = vmul.f32 %v577, %v582
  %586 = vrot.lane.b32.xlu0 %v584, 32
  %v587 = vpop.permute.xlu0 %586
  %v589 = vadd.f32 %v579, %v587
  %v590 = vtanh.pop %v589
  %592 = vrot.lane.b32.xlu0 %v590, 64
  %v593 = vpop.permute.xlu0 %592
  %v595 = vmul.f32 %v577, %v593
  %597 = vrot.lane.b32.xlu0 %v595, 32
  %v598 = vpop.permute.xlu0 %597
  %s600 = scalar_lea.vmem [#allocation3], 24
  %601 = vst.msk [vmem:[%s600] sm:$0xff] %vm183, %v598
  %s602 = scalar_lea.vmem [#allocation2], 32
  %v603 = vld [vmem:[%s602] sm:$0xff]
  %v604 = vsel %vm183, %v598, 0
  %606 = vmatprep.subr.mxu0 0.0
  %607 = vmatpush1.msra.mxu0 %v178
  %608 = vmatprep.subr.mxu0 0.0
  %609 = vmatpush1.msra.mxu0 %v179
  %610 = vmatprep.subr.mxu0 0.0
  %611 = vmatpush1.msra.mxu0 %v180
  %612 = vmatprep.subr.mxu0 0.0
  %613 = vmatpush1.msra.mxu0 %v181
  %614 = vmatprep.subr.mxu0 0.0
  %615 = vmatpush1.msra.mxu0 0.0
  %616 = vmatprep.subr.mxu0 0.0
  %617 = vmatpush1.msra.mxu0 0.0
  %618 = vmatprep.subr.mxu0 0.0
  %619 = vmatpush1.msra.mxu0 0.0
  %620 = vmatprep.subr.mxu0 0.0
  %621 = vmatpush1.msra.mxu0 0.0
  %622 = vmatprep.subr.mxu0 0.0
  %623 = vmatpush1.msra.mxu0 0.0
  %624 = vmatprep.subr.mxu0 0.0
  %625 = vmatpush1.msra.mxu0 0.0
  %626 = vmatprep.subr.mxu0 0.0
  %627 = vmatpush1.msra.mxu0 0.0
  %628 = vmatprep.subr.mxu0 0.0
  %629 = vmatpush1.msra.mxu0 0.0
  %630 = vmatprep.subr.mxu0 0.0
  %631 = vmatpush1.msra.mxu0 0.0
  %632 = vmatprep.subr.mxu0 0.0
  %633 = vmatpush1.msra.mxu0 0.0
  %634 = vmatprep.subr.mxu0 0.0
  %635 = vmatpush1.msra.mxu0 0.0
  %636 = vmatprep.subr.mxu0 0.0
  %637 = vmatpush1.msra.mxu0 0.0
  %638 = vmatprep.subr.mxu0 0.0
  %639 = vmatpush1.msra.mxu0 0.0
  %640 = vmatprep.subr.mxu0 0.0
  %641 = vmatpush1.msra.mxu0 0.0
  %642 = vmatprep.subr.mxu0 0.0
  %643 = vmatpush1.msra.mxu0 0.0
  %644 = vmatprep.subr.mxu0 0.0
  %645 = vmatpush1.msra.mxu0 0.0
  %646 = vmatprep.subr.mxu0 0.0
  %647 = vmatpush1.msra.mxu0 0.0
  %648 = vmatprep.subr.mxu0 0.0
  %649 = vmatpush1.msra.mxu0 0.0
  %650 = vmatprep.subr.mxu0 0.0
  %651 = vmatpush1.msra.mxu0 0.0
  %652 = vmatprep.subr.mxu0 0.0
  %653 = vmatpush1.msra.mxu0 0.0
  %654 = vmatprep.subr.mxu0 0.0
  %655 = vmatpush1.msra.mxu0 0.0
  %656 = vmatprep.subr.mxu0 0.0
  %657 = vmatpush1.msra.mxu0 0.0
  %658 = vmatprep.subr.mxu0 0.0
  %659 = vmatpush1.msra.mxu0 0.0
  %660 = vmatprep.subr.mxu0 0.0
  %661 = vmatpush1.msra.mxu0 0.0
  %662 = vmatprep.subr.mxu0 0.0
  %663 = vmatpush1.msra.mxu0 0.0
  %664 = vmatprep.subr.mxu0 0.0
  %665 = vmatpush1.msra.mxu0 0.0
  %666 = vmatprep.subr.mxu0 0.0
  %667 = vmatpush1.msra.mxu0 0.0
  %668 = vmatprep.subr.mxu0 0.0
  %669 = vmatpush1.msra.mxu0 0.0
  %670 = vmatprep.mubr.f32.mxu0 0.0
  %671 = vmatmul.mubr.f32.gmra.mrb[0].mxu0 %v604
  %v672 = vpop.f32.mrb[0].mxu0
  %v673 = vadd.f32 0.0, %v672
  %v674 = vpop.f32.mrb[0].mxu0
  %675 = vdwg.mxu0
  %v676 = vadd.f32 %v603, %v673
  %v677 = vxor.u32 %v676, 2147483648
  %v678 = vmul.f32 %v677, 1.442695
  %v679 = vpow.pop %v678
  %v680 = vadd.f32 %v679, 1.0
  %v681 = vrcp.pop %v680
  %v682 = vmul.f32 1.0, %v681
  %v683 = vtanh.pop %v676
  %v684 = vmul.f32 %v682, %v589
  %686 = vrot.lane.b32.xlu0 %v683, 64
  %v687 = vpop.permute.xlu0 %686
  %v689 = vmul.f32 %v682, %v687
  %691 = vrot.lane.b32.xlu0 %v689, 32
  %v692 = vpop.permute.xlu0 %691
  %v694 = vadd.f32 %v684, %v692
  %v695 = vtanh.pop %v694
  %697 = vrot.lane.b32.xlu0 %v695, 64
  %v698 = vpop.permute.xlu0 %697
  %v700 = vmul.f32 %v682, %v698
  %702 = vrot.lane.b32.xlu0 %v700, 32
  %v703 = vpop.permute.xlu0 %702
  %s705 = scalar_lea.vmem [#allocation3], 32
  %706 = vst.msk [vmem:[%s705] sm:$0xff] %vm183, %v703
  %s707 = scalar_lea.vmem [#allocation2], 40
  %v708 = vld [vmem:[%s707] sm:$0xff]
  %v709 = vsel %vm183, %v703, 0
  %711 = vmatprep.subr.mxu0 0.0
  %712 = vmatpush1.msra.mxu0 %v178
  %713 = vmatprep.subr.mxu0 0.0
  %714 = vmatpush1.msra.mxu0 %v179
  %715 = vmatprep.subr.mxu0 0.0
  %716 = vmatpush1.msra.mxu0 %v180
  %717 = vmatprep.subr.mxu0 0.0
  %718 = vmatpush1.msra.mxu0 %v181
  %719 = vmatprep.subr.mxu0 0.0
  %720 = vmatpush1.msra.mxu0 0.0
  %721 = vmatprep.subr.mxu0 0.0
  %722 = vmatpush1.msra.mxu0 0.0
  %723 = vmatprep.subr.mxu0 0.0
  %724 = vmatpush1.msra.mxu0 0.0
  %725 = vmatprep.subr.mxu0 0.0
  %726 = vmatpush1.msra.mxu0 0.0
  %727 = vmatprep.subr.mxu0 0.0
  %728 = vmatpush1.msra.mxu0 0.0
  %729 = vmatprep.subr.mxu0 0.0
  %730 = vmatpush1.msra.mxu0 0.0
  %731 = vmatprep.subr.mxu0 0.0
  %732 = vmatpush1.msra.mxu0 0.0
  %733 = vmatprep.subr.mxu0 0.0
  %734 = vmatpush1.msra.mxu0 0.0
  %735 = vmatprep.subr.mxu0 0.0
  %736 = vmatpush1.msra.mxu0 0.0
  %737 = vmatprep.subr.mxu0 0.0
  %738 = vmatpush1.msra.mxu0 0.0
  %739 = vmatprep.subr.mxu0 0.0
  %740 = vmatpush1.msra.mxu0 0.0
  %741 = vmatprep.subr.mxu0 0.0
  %742 = vmatpush1.msra.mxu0 0.0
  %743 = vmatprep.subr.mxu0 0.0
  %744 = vmatpush1.msra.mxu0 0.0
  %745 = vmatprep.subr.mxu0 0.0
  %746 = vmatpush1.msra.mxu0 0.0
  %747 = vmatprep.subr.mxu0 0.0
  %748 = vmatpush1.msra.mxu0 0.0
  %749 = vmatprep.subr.mxu0 0.0
  %750 = vmatpush1.msra.mxu0 0.0
  %751 = vmatprep.subr.mxu0 0.0
  %752 = vmatpush1.msra.mxu0 0.0
  %753 = vmatprep.subr.mxu0 0.0
  %754 = vmatpush1.msra.mxu0 0.0
  %755 = vmatprep.subr.mxu0 0.0
  %756 = vmatpush1.msra.mxu0 0.0
  %757 = vmatprep.subr.mxu0 0.0
  %758 = vmatpush1.msra.mxu0 0.0
  %759 = vmatprep.subr.mxu0 0.0
  %760 = vmatpush1.msra.mxu0 0.0
  %761 = vmatprep.subr.mxu0 0.0
  %762 = vmatpush1.msra.mxu0 0.0
  %763 = vmatprep.subr.mxu0 0.0
  %764 = vmatpush1.msra.mxu0 0.0
  %765 = vmatprep.subr.mxu0 0.0
  %766 = vmatpush1.msra.mxu0 0.0
  %767 = vmatprep.subr.mxu0 0.0
  %768 = vmatpush1.msra.mxu0 0.0
  %769 = vmatprep.subr.mxu0 0.0
  %770 = vmatpush1.msra.mxu0 0.0
  %771 = vmatprep.subr.mxu0 0.0
  %772 = vmatpush1.msra.mxu0 0.0
  %773 = vmatprep.subr.mxu0 0.0
  %774 = vmatpush1.msra.mxu0 0.0
  %775 = vmatprep.mubr.f32.mxu0 0.0
  %776 = vmatmul.mubr.f32.gmra.mrb[0].mxu0 %v709
  %v777 = vpop.f32.mrb[0].mxu0
  %v778 = vadd.f32 0.0, %v777
  %v779 = vpop.f32.mrb[0].mxu0
  %780 = vdwg.mxu0
  %v781 = vadd.f32 %v708, %v778
  %v782 = vxor.u32 %v781, 2147483648
  %v783 = vmul.f32 %v782, 1.442695
  %v784 = vpow.pop %v783
  %v785 = vadd.f32 %v784, 1.0
  %v786 = vrcp.pop %v785
  %v787 = vmul.f32 1.0, %v786
  %v788 = vtanh.pop %v781
  %v789 = vmul.f32 %v787, %v694
  %791 = vrot.lane.b32.xlu0 %v788, 64
  %v792 = vpop.permute.xlu0 %791
  %v794 = vmul.f32 %v787, %v792
  %796 = vrot.lane.b32.xlu0 %v794, 32
  %v797 = vpop.permute.xlu0 %796
  %v799 = vadd.f32 %v789, %v797
  %v800 = vtanh.pop %v799
  %802 = vrot.lane.b32.xlu0 %v800, 64
  %v803 = vpop.permute.xlu0 %802
  %v805 = vmul.f32 %v787, %v803
  %807 = vrot.lane.b32.xlu0 %v805, 32
  %v808 = vpop.permute.xlu0 %807
  %s810 = scalar_lea.vmem [#allocation3], 40
  %811 = vst.msk [vmem:[%s810] sm:$0xff] %vm183, %v808
  %s812 = scalar_lea.vmem [#allocation2], 48
  %v813 = vld [vmem:[%s812] sm:$0xff]
  %v814 = vsel %vm183, %v808, 0
  %816 = vmatprep.subr.mxu0 0.0
  %817 = vmatpush1.msra.mxu0 %v178
  %818 = vmatprep.subr.mxu0 0.0
  %819 = vmatpush1.msra.mxu0 %v179
  %820 = vmatprep.subr.mxu0 0.0
  %821 = vmatpush1.msra.mxu0 %v180
  %822 = vmatprep.subr.mxu0 0.0
  %823 = vmatpush1.msra.mxu0 %v181
  %824 = vmatprep.subr.mxu0 0.0
  %825 = vmatpush1.msra.mxu0 0.0
  %826 = vmatprep.subr.mxu0 0.0
  %827 = vmatpush1.msra.mxu0 0.0
  %828 = vmatprep.subr.mxu0 0.0
  %829 = vmatpush1.msra.mxu0 0.0
  %830 = vmatprep.subr.mxu0 0.0
  %831 = vmatpush1.msra.mxu0 0.0
  %832 = vmatprep.subr.mxu0 0.0
  %833 = vmatpush1.msra.mxu0 0.0
  %834 = vmatprep.subr.mxu0 0.0
  %835 = vmatpush1.msra.mxu0 0.0
  %836 = vmatprep.subr.mxu0 0.0
  %837 = vmatpush1.msra.mxu0 0.0
  %838 = vmatprep.subr.mxu0 0.0
  %839 = vmatpush1.msra.mxu0 0.0
  %840 = vmatprep.subr.mxu0 0.0
  %841 = vmatpush1.msra.mxu0 0.0
  %842 = vmatprep.subr.mxu0 0.0
  %843 = vmatpush1.msra.mxu0 0.0
  %844 = vmatprep.subr.mxu0 0.0
  %845 = vmatpush1.msra.mxu0 0.0
  %846 = vmatprep.subr.mxu0 0.0
  %847 = vmatpush1.msra.mxu0 0.0
  %848 = vmatprep.subr.mxu0 0.0
  %849 = vmatpush1.msra.mxu0 0.0
  %850 = vmatprep.subr.mxu0 0.0
  %851 = vmatpush1.msra.mxu0 0.0
  %852 = vmatprep.subr.mxu0 0.0
  %853 = vmatpush1.msra.mxu0 0.0
  %854 = vmatprep.subr.mxu0 0.0
  %855 = vmatpush1.msra.mxu0 0.0
  %856 = vmatprep.subr.mxu0 0.0
  %857 = vmatpush1.msra.mxu0 0.0
  %858 = vmatprep.subr.mxu0 0.0
  %859 = vmatpush1.msra.mxu0 0.0
  %860 = vmatprep.subr.mxu0 0.0
  %861 = vmatpush1.msra.mxu0 0.0
  %862 = vmatprep.subr.mxu0 0.0
  %863 = vmatpush1.msra.mxu0 0.0
  %864 = vmatprep.subr.mxu0 0.0
  %865 = vmatpush1.msra.mxu0 0.0
  %866 = vmatprep.subr.mxu0 0.0
  %867 = vmatpush1.msra.mxu0 0.0
  %868 = vmatprep.subr.mxu0 0.0
  %869 = vmatpush1.msra.mxu0 0.0
  %870 = vmatprep.subr.mxu0 0.0
  %871 = vmatpush1.msra.mxu0 0.0
  %872 = vmatprep.subr.mxu0 0.0
  %873 = vmatpush1.msra.mxu0 0.0
  %874 = vmatprep.subr.mxu0 0.0
  %875 = vmatpush1.msra.mxu0 0.0
  %876 = vmatprep.subr.mxu0 0.0
  %877 = vmatpush1.msra.mxu0 0.0
  %878 = vmatprep.subr.mxu0 0.0
  %879 = vmatpush1.msra.mxu0 0.0
  %880 = vmatprep.mubr.f32.mxu0 0.0
  %881 = vmatmul.mubr.f32.gmra.mrb[0].mxu0 %v814
  %v882 = vpop.f32.mrb[0].mxu0
  %v883 = vadd.f32 0.0, %v882
  %v884 = vpop.f32.mrb[0].mxu0
  %885 = vdwg.mxu0
  %v886 = vadd.f32 %v813, %v883
  %v887 = vxor.u32 %v886, 2147483648
  %v888 = vmul.f32 %v887, 1.442695
  %v889 = vpow.pop %v888
  %v890 = vadd.f32 %v889, 1.0
  %v891 = vrcp.pop %v890
  %v892 = vmul.f32 1.0, %v891
  %v893 = vtanh.pop %v886
  %v894 = vmul.f32 %v892, %v799
  %896 = vrot.lane.b32.xlu0 %v893, 64
  %v897 = vpop.permute.xlu0 %896
  %v899 = vmul.f32 %v892, %v897
  %901 = vrot.lane.b32.xlu0 %v899, 32
  %v902 = vpop.permute.xlu0 %901
  %v904 = vadd.f32 %v894, %v902
  %v905 = vtanh.pop %v904
  %907 = vrot.lane.b32.xlu0 %v905, 64
  %v908 = vpop.permute.xlu0 %907
  %v910 = vmul.f32 %v892, %v908
  %912 = vrot.lane.b32.xlu0 %v910, 32
  %v913 = vpop.permute.xlu0 %912
  %s915 = scalar_lea.vmem [#allocation3], 48
  %916 = vst.msk [vmem:[%s915] sm:$0xff] %vm183, %v913
  %s917 = scalar_lea.vmem [#allocation2], 56
  %v918 = vld [vmem:[%s917] sm:$0xff]
  %v919 = vsel %vm183, %v913, 0
  %921 = vmatprep.subr.mxu0 0.0
  %922 = vmatpush1.msra.mxu0 %v178
  %923 = vmatprep.subr.mxu0 0.0
  %924 = vmatpush1.msra.mxu0 %v179
  %925 = vmatprep.subr.mxu0 0.0
  %926 = vmatpush1.msra.mxu0 %v180
  %927 = vmatprep.subr.mxu0 0.0
  %928 = vmatpush1.msra.mxu0 %v181
  %929 = vmatprep.subr.mxu0 0.0
  %930 = vmatpush1.msra.mxu0 0.0
  %931 = vmatprep.subr.mxu0 0.0
  %932 = vmatpush1.msra.mxu0 0.0
  %933 = vmatprep.subr.mxu0 0.0
  %934 = vmatpush1.msra.mxu0 0.0
  %935 = vmatprep.subr.mxu0 0.0
  %936 = vmatpush1.msra.mxu0 0.0
  %937 = vmatprep.subr.mxu0 0.0
  %938 = vmatpush1.msra.mxu0 0.0
  %939 = vmatprep.subr.mxu0 0.0
  %940 = vmatpush1.msra.mxu0 0.0
  %941 = vmatprep.subr.mxu0 0.0
  %942 = vmatpush1.msra.mxu0 0.0
  %943 = vmatprep.subr.mxu0 0.0
  %944 = vmatpush1.msra.mxu0 0.0
  %945 = vmatprep.subr.mxu0 0.0
  %946 = vmatpush1.msra.mxu0 0.0
  %947 = vmatprep.subr.mxu0 0.0
  %948 = vmatpush1.msra.mxu0 0.0
  %949 = vmatprep.subr.mxu0 0.0
  %950 = vmatpush1.msra.mxu0 0.0
  %951 = vmatprep.subr.mxu0 0.0
  %952 = vmatpush1.msra.mxu0 0.0
  %953 = vmatprep.subr.mxu0 0.0
  %954 = vmatpush1.msra.mxu0 0.0
  %955 = vmatprep.subr.mxu0 0.0
  %956 = vmatpush1.msra.mxu0 0.0
  %957 = vmatprep.subr.mxu0 0.0
  %958 = vmatpush1.msra.mxu0 0.0
  %959 = vmatprep.subr.mxu0 0.0
  %960 = vmatpush1.msra.mxu0 0.0
  %961 = vmatprep.subr.mxu0 0.0
  %962 = vmatpush1.msra.mxu0 0.0
  %963 = vmatprep.subr.mxu0 0.0
  %964 = vmatpush1.msra.mxu0 0.0
  %965 = vmatprep.subr.mxu0 0.0
  %966 = vmatpush1.msra.mxu0 0.0
  %967 = vmatprep.subr.mxu0 0.0
  %968 = vmatpush1.msra.mxu0 0.0
  %969 = vmatprep.subr.mxu0 0.0
  %970 = vmatpush1.msra.mxu0 0.0
  %971 = vmatprep.subr.mxu0 0.0
  %972 = vmatpush1.msra.mxu0 0.0
  %973 = vmatprep.subr.mxu0 0.0
  %974 = vmatpush1.msra.mxu0 0.0
  %975 = vmatprep.subr.mxu0 0.0
  %976 = vmatpush1.msra.mxu0 0.0
  %977 = vmatprep.subr.mxu0 0.0
  %978 = vmatpush1.msra.mxu0 0.0
  %979 = vmatprep.subr.mxu0 0.0
  %980 = vmatpush1.msra.mxu0 0.0
  %981 = vmatprep.subr.mxu0 0.0
  %982 = vmatpush1.msra.mxu0 0.0
  %983 = vmatprep.subr.mxu0 0.0
  %984 = vmatpush1.msra.mxu0 0.0
  %985 = vmatprep.mubr.f32.mxu0 0.0
  %986 = vmatmul.mubr.f32.gmra.mrb[0].mxu0 %v919
  %v987 = vpop.f32.mrb[0].mxu0
  %v988 = vadd.f32 0.0, %v987
  %v989 = vpop.f32.mrb[0].mxu0
  %990 = vdwg.mxu0
  %v991 = vadd.f32 %v918, %v988
  %v992 = vxor.u32 %v991, 2147483648
  %v993 = vmul.f32 %v992, 1.442695
  %v994 = vpow.pop %v993
  %v995 = vadd.f32 %v994, 1.0
  %v996 = vrcp.pop %v995
  %v997 = vmul.f32 1.0, %v996
  %v998 = vtanh.pop %v991
  %v999 = vmul.f32 %v997, %v904
  %1001 = vrot.lane.b32.xlu0 %v998, 64
  %v1002 = vpop.permute.xlu0 %1001
  %v1004 = vmul.f32 %v997, %v1002
  %1006 = vrot.lane.b32.xlu0 %v1004, 32
  %v1007 = vpop.permute.xlu0 %1006
  %v1009 = vadd.f32 %v999, %v1007
  %v1010 = vtanh.pop %v1009
  %1012 = vrot.lane.b32.xlu0 %v1010, 64
  %v1013 = vpop.permute.xlu0 %1012
  %v1015 = vmul.f32 %v997, %v1013
  %1017 = vrot.lane.b32.xlu0 %v1015, 32
  %v1018 = vpop.permute.xlu0 %1017
  %s1020 = scalar_lea.vmem [#allocation3], 56
  %1021 = vst.msk [vmem:[%s1020] sm:$0xff] %vm183, %v1018
  %v1022 = vld [vmem:[#allocation3] sm:$0xff]
  %v1023 = vld [vmem:[#allocation3 + $0x8] sm:$0xff]
  %v1024 = vld [vmem:[#allocation3 + $0x10] sm:$0xff]
  %v1025 = vld [vmem:[#allocation3 + $0x18] sm:$0xff]
  %v1026 = vld [vmem:[#allocation3 + $0x20] sm:$0xff]
  %v1027 = vld [vmem:[#allocation3 + $0x28] sm:$0xff]
  %v1028 = vld [vmem:[#allocation3 + $0x30] sm:$0xff]
  %v1029 = vld [vmem:[#allocation3 + $0x38] sm:$0xff]
  %v1030 = vld [vmem:[%s4] sm:$0xff]
  %v1031 = vld [vmem:[%s4 + $0x8] sm:$0xff]
  %v1032 = vld [vmem:[%s4 + $0x10] sm:$0xff]
  %v1033 = vld [vmem:[%s4 + $0x18] sm:$0xff]
  %v1034 = vld [vmem:[%s5] sm:$0x1]
  %v1036 = vlaneseq
  %v1037 = vshrl.u32 %v1036, 7
  %v1038 = vsub.s32 0, %v1037
  %v1039 = vrot.slane %v1034, %v1038
  %v1042 = vsel %vm183, %v1022, 0
  %v1045 = vsel %vm183, %v1023, 0
  %v1048 = vsel %vm183, %v1024, 0
  %v1051 = vsel %vm183, %v1025, 0
  %v1054 = vsel %vm183, %v1026, 0
  %v1057 = vsel %vm183, %v1027, 0
  %v1060 = vsel %vm183, %v1028, 0
  %v1063 = vsel %vm183, %v1029, 0
  %1065 = vmatprep.subr.mxu0 0.0
  %1066 = vmatpush1.msra.mxu0 %v1030
  %1067 = vmatprep.subr.mxu0 0.0
  %1068 = vmatpush1.msra.mxu0 %v1031
  %1069 = vmatprep.subr.mxu0 0.0
  %1070 = vmatpush1.msra.mxu0 %v1032
  %1071 = vmatprep.subr.mxu0 0.0
  %1072 = vmatpush1.msra.mxu0 %v1033
  %1073 = vmatprep.subr.mxu0 0.0
  %1074 = vmatpush1.msra.mxu0 0.0
  %1075 = vmatprep.subr.mxu0 0.0
  %1076 = vmatpush1.msra.mxu0 0.0
  %1077 = vmatprep.subr.mxu0 0.0
  %1078 = vmatpush1.msra.mxu0 0.0
  %1079 = vmatprep.subr.mxu0 0.0
  %1080 = vmatpush1.msra.mxu0 0.0
  %1081 = vmatprep.subr.mxu0 0.0
  %1082 = vmatpush1.msra.mxu0 0.0
  %1083 = vmatprep.subr.mxu0 0.0
  %1084 = vmatpush1.msra.mxu0 0.0
  %1085 = vmatprep.subr.mxu0 0.0
  %1086 = vmatpush1.msra.mxu0 0.0
  %1087 = vmatprep.subr.mxu0 0.0
  %1088 = vmatpush1.msra.mxu0 0.0
  %1089 = vmatprep.subr.mxu0 0.0
  %1090 = vmatpush1.msra.mxu0 0.0
  %1091 = vmatprep.subr.mxu0 0.0
  %1092 = vmatpush1.msra.mxu0 0.0
  %1093 = vmatprep.subr.mxu0 0.0
  %1094 = vmatpush1.msra.mxu0 0.0
  %1095 = vmatprep.subr.mxu0 0.0
  %1096 = vmatpush1.msra.mxu0 0.0
  %1097 = vmatprep.subr.mxu0 0.0
  %1098 = vmatpush1.msra.mxu0 0.0
  %1099 = vmatprep.subr.mxu0 0.0
  %1100 = vmatpush1.msra.mxu0 0.0
  %1101 = vmatprep.subr.mxu0 0.0
  %1102 = vmatpush1.msra.mxu0 0.0
  %1103 = vmatprep.subr.mxu0 0.0
  %1104 = vmatpush1.msra.mxu0 0.0
  %1105 = vmatprep.subr.mxu0 0.0
  %1106 = vmatpush1.msra.mxu0 0.0
  %1107 = vmatprep.subr.mxu0 0.0
  %1108 = vmatpush1.msra.mxu0 0.0
  %1109 = vmatprep.subr.mxu0 0.0
  %1110 = vmatpush1.msra.mxu0 0.0
  %1111 = vmatprep.subr.mxu0 0.0
  %1112 = vmatpush1.msra.mxu0 0.0
  %1113 = vmatprep.subr.mxu0 0.0
  %1114 = vmatpush1.msra.mxu0 0.0
  %1115 = vmatprep.subr.mxu0 0.0
  %1116 = vmatpush1.msra.mxu0 0.0
  %1117 = vmatprep.subr.mxu0 0.0
  %1118 = vmatpush1.msra.mxu0 0.0
  %1119 = vmatprep.subr.mxu0 0.0
  %1120 = vmatpush1.msra.mxu0 0.0
  %1121 = vmatprep.subr.mxu0 0.0
  %1122 = vmatpush1.msra.mxu0 0.0
  %1123 = vmatprep.subr.mxu0 0.0
  %1124 = vmatpush1.msra.mxu0 0.0
  %1125 = vmatprep.subr.mxu0 0.0
  %1126 = vmatpush1.msra.mxu0 0.0
  %1127 = vmatprep.subr.mxu0 0.0
  %1128 = vmatpush1.msra.mxu0 0.0
  %1129 = vmatprep.mubr.f32.mxu0 0.0
  %1130 = vmatmul.mubr.f32.gmra.mrb[0].mxu0 %v1042
  %v1131 = vpop.f32.mrb[0].mxu0
  %v1132 = vadd.f32 %v1039, %v1131
  %v1133 = vpop.f32.mrb[0].mxu0
  %1134 = vmatprep.mubr.f32.mxu0 0.0
  %1135 = vmatmul.mubr.f32.gmra.mrb[0].mxu0 %v1045
  %v1136 = vpop.f32.mrb[0].mxu0
  %v1137 = vadd.f32 %v1039, %v1136
  %v1138 = vpop.f32.mrb[0].mxu0
  %1139 = vmatprep.mubr.f32.mxu0 0.0
  %1140 = vmatmul.mubr.f32.gmra.mrb[0].mxu0 %v1048
  %v1141 = vpop.f32.mrb[0].mxu0
  %v1142 = vadd.f32 %v1039, %v1141
  %v1143 = vpop.f32.mrb[0].mxu0
  %1144 = vmatprep.mubr.f32.mxu0 0.0
  %1145 = vmatmul.mubr.f32.gmra.mrb[0].mxu0 %v1051
  %v1146 = vpop.f32.mrb[0].mxu0
  %v1147 = vadd.f32 %v1039, %v1146
  %v1148 = vpop.f32.mrb[0].mxu0
  %1149 = vmatprep.mubr.f32.mxu0 0.0
  %1150 = vmatmul.mubr.f32.gmra.mrb[0].mxu0 %v1054
  %v1151 = vpop.f32.mrb[0].mxu0
  %v1152 = vadd.f32 %v1039, %v1151
  %v1153 = vpop.f32.mrb[0].mxu0
  %1154 = vmatprep.mubr.f32.mxu0 0.0
  %1155 = vmatmul.mubr.f32.gmra.mrb[0].mxu0 %v1057
  %v1156 = vpop.f32.mrb[0].mxu0
  %v1157 = vadd.f32 %v1039, %v1156
  %v1158 = vpop.f32.mrb[0].mxu0
  %1159 = vmatprep.mubr.f32.mxu0 0.0
  %1160 = vmatmul.mubr.f32.gmra.mrb[0].mxu0 %v1060
  %v1161 = vpop.f32.mrb[0].mxu0
  %v1162 = vadd.f32 %v1039, %v1161
  %v1163 = vpop.f32.mrb[0].mxu0
  %1164 = vmatprep.mubr.f32.mxu0 0.0
  %1165 = vmatmul.mubr.f32.gmra.mrb[0].mxu0 %v1063
  %v1166 = vpop.f32.mrb[0].mxu0
  %v1167 = vadd.f32 %v1039, %v1166
  %v1168 = vpop.f32.mrb[0].mxu0
  %1169 = vdwg.mxu0
  %1170 = vst [vmem:[%s6] sm:$0xff] %v1132
  %1171 = vst [vmem:[%s6 + $0x8] sm:$0xff] %v1137
  %1172 = vst [vmem:[%s6 + $0x10] sm:$0xff] %v1142
  %1173 = vst [vmem:[%s6 + $0x18] sm:$0xff] %v1147
  %1174 = vst [vmem:[%s6 + $0x20] sm:$0xff] %v1152
  %1175 = vst [vmem:[%s6 + $0x28] sm:$0xff] %v1157
  %1176 = vst [vmem:[%s6 + $0x30] sm:$0xff] %v1162
  %1177 = vst [vmem:[%s6 + $0x38] sm:$0xff] %v1167
  // Predicated region
  $region26: #{lstm_classifier_forward.1} parent=0 // pred_check
    _
  $region27: #{lstm_classifier_forward.1} parent=0 // pred_check_branch
    %1179 = sbr.rel (0) target = $region29
  $region28: #{lstm_classifier_forward.1} parent=0 // pred_region
    _
  $region29: #{lstm_classifier_forward.1} parent=0 // pred_fallthru
    _
  // Predicated region
  $region30: #{lstm_classifier_forward.1} parent=0 // pred_check
    _
  $region31: #{lstm_classifier_forward.1} parent=0 // pred_check_branch
    %1181 = sbr.rel (0) target = $region33
  $region32: #{lstm_classifier_forward.1} parent=0 // pred_region
    _
  $region33: #{lstm_classifier_forward.1} parent=0 // pred_fallthru
    _

</llo_original>
